<compile_context>
chip_gen: v6e
topology: v6e:2x2x1
jax: 0.10.0
libtpu: 0.0.40
codegen_flags: <defaults>
</compile_context>

<pallas_src>
import functools

import jax
import jax.numpy as jnp
import numpy as np
from jax.experimental import pallas as pl
from jax.experimental.pallas import tpu as pltpu


def _scl_kernel(xi_ref, xjt_ref, ohj_ref, ohi_ref, reli_ref,
                out_ref, cls_acc, *, resident_j, inv_temp):
    j = pl.program_id(1)

    @pl.when(j == 0)
    def _():
        cls_acc[...] = jnp.zeros_like(cls_acc)

    # j-operand slab: resident -> dynamic leading-axis index, streamed -> [0].
    slab = j if resident_j else 0
    xjt = xjt_ref[slab]                                # (D, tn)  pre-transposed, pre-scaled
    ohj = ohj_ref[slab]                                # (tn, Cp) one-hot(y_j)

    xi = xi_ref[...]                                   # (tm, D)  pre-scaled normalized rows
    # xi/xjt already carry sqrt(1/T), so logits == (x_i . x_j)/(|x_i||x_j| T).
    # Subtracting the constant 1/T keeps exp's argument <= 0; the constant
    # cancels exactly in the num/den ratio below.
    logits = jnp.dot(xi, xjt, preferred_element_type=jnp.float32)   # (tm, tn)
    sim = jnp.exp(logits - inv_temp)

    # Per-class column sums: cls_acc[i, c] += sum_j sim[i, j] * onehot(y_j)[c]
    cls_acc[...] += jnp.dot(sim, ohj, preferred_element_type=jnp.float32)

    @pl.when(j == pl.num_programs(1) - 1)
    def _():
        num = jnp.sum(ohi_ref[...] * cls_acc[...], axis=1, keepdims=True)   # (tm,1)
        den = jnp.sum(reli_ref[...] * cls_acc[...], axis=1, keepdims=True)  # (tm,1)
        out_ref[...] = jnp.log(num) - jnp.log(den)


def supervised_contrastive_loss(x, y, relation_mat, *, temperature=0.07,
                                tm=None, tn=None):
    """x: (N, D) float, y: (N,) int32, relation_mat: (C, C) float -> scalar loss."""
    N, D = x.shape
    C = relation_mat.shape[0]
    Cp = max(8, ((C + 7) // 8) * 8)                    # pad class dim for clean tiling

    # --- hoisted preprocessing (done once, outside the N x N grid loop) ------
    x = x.astype(jnp.float32)
    norm = jnp.sqrt(jnp.sum(x * x, axis=1, keepdims=True))
    # Fold sqrt(1/temperature) into the normalization: (s*xi).(s*xj) = (xi.xj)/T.
    scale = jnp.float32(1.0) / jnp.sqrt(jnp.float32(temperature))
    xn = x * (scale / jnp.maximum(norm, 1e-12))        # F.normalize(x,dim=1)*sqrt(1/T)

    oh = jax.nn.one_hot(y, Cp, dtype=jnp.float32)      # (N, Cp)
    rel_pad = jnp.zeros((Cp, Cp), jnp.float32).at[:C, :C].set(
        relation_mat.astype(jnp.float32))
    rel_rows = rel_pad[y]                              # (N, Cp): R[y_i, :]

    # --- tile selection -------------------------------------------------------
    if tm is None:
        tm = N
        for c in (256, 128, 64, 32, 16, 8):            # keep >=2 row tiles (v7x has 2 TCs)
            if N % c == 0 and N // c >= 2:
                tm = c
                break

    # keep full j-operands resident in VMEM when small (avoids (N//tm)x restream)
    resident_j = 2 * 4 * (N * D + N * Cp) <= (4 << 20)

    def _vmem_bytes(tn_):
        nj_ = N // tn_
        words = 2 * tm * D                                         # xi (double-buffered)
        if resident_j:
            words += 2 * (nj_ * D * tn_ + nj_ * tn_ * Cp)          # resident slabs
        else:
            words += 2 * (D * tn_ + tn_ * Cp)                      # streamed j tiles
        words += 2 * (tm * Cp) * 2                                  # ohi + reli
        words += 2 * tm                                             # out
        words += tm * Cp                                            # cls_acc scratch
        return 4 * words

    if tn is None:
        candidates = [c for c in (512, 256, 128, 64, 32, 16, 8) if N % c == 0] or [N]
        tn = candidates[0]
        for c in candidates:                                        # largest that fits budget
            if _vmem_bytes(c) <= (20 << 20):
                tn = c
                break
    assert N % tm == 0 and N % tn == 0, "N must be divisible by the tile sizes"

    nj = N // tn
    vmem_limit = int(min(max(2 * _vmem_bytes(tn), 32 << 20), 48 << 20))

    # --- j-operand layout: (nj, D, tn) / (nj, tn, Cp) slabs -------------------
    xnt = xn.T.reshape(D, nj, tn).transpose(1, 0, 2)   # (nj, D, tn)   lane-dense cols
    ohj = oh.reshape(nj, tn, Cp)                       # (nj, tn, Cp)

    if resident_j:
        xjt_spec = pl.BlockSpec((nj, D, tn), lambda i, j: (0, 0, 0))
        ohj_spec = pl.BlockSpec((nj, tn, Cp), lambda i, j: (0, 0, 0))
    else:
        xjt_spec = pl.BlockSpec((1, D, tn), lambda i, j: (j, 0, 0))
        ohj_spec = pl.BlockSpec((1, tn, Cp), lambda i, j: (j, 0, 0))

    restream = 1 if resident_j else (N // tm)
    cost = pl.CostEstimate(
        flops=2 * N * N * (D + Cp) + 2 * N * N,
        transcendentals=N * N,
        bytes_accessed=4 * (N * D + restream * (N * D + N * Cp) + 2 * N * Cp + N),
    )

    log_ratio = pl.pallas_call(
        functools.partial(_scl_kernel, resident_j=resident_j,
                          inv_temp=float(1.0 / temperature)),
        out_shape=jax.ShapeDtypeStruct((N, 1), jnp.float32),
        grid_spec=pltpu.PrefetchScalarGridSpec(
            num_scalar_prefetch=0,
            grid=(N // tm, N // tn),                   # (row tiles, col tiles=reduction)
            in_specs=[
                pl.BlockSpec((tm, D), lambda i, j: (i, 0)),    # scaled-normalized rows
                xjt_spec,                                       # scaled-normalized cols (T)
                ohj_spec,                                       # one-hot(y_j)
                pl.BlockSpec((tm, Cp), lambda i, j: (i, 0)),   # one-hot(y_i)
                pl.BlockSpec((tm, Cp), lambda i, j: (i, 0)),   # relation row R[y_i, :]
            ],
            out_specs=pl.BlockSpec((tm, 1), lambda i, j: (i, 0)),
            scratch_shapes=[pltpu.VMEM((tm, Cp), jnp.float32)],  # per-class column sums
        ),
        compiler_params=pltpu.CompilerParams(
            dimension_semantics=("parallel", "arbitrary"),
            vmem_limit_bytes=vmem_limit),
        cost_estimate=cost,
    )(xn, xnt, ohj, oh, rel_rows)

    # NOTE: if no related-class samples are present for some row, den==0 and the
    # result is -inf/NaN -- identical to the PyTorch reference behavior.
    return -jnp.mean(log_ratio)


def supervised_contrastive_loss_reference(x, y, relation_mat, temperature=0.07):
    """Pure-JAX reference mirroring the PyTorch module (default forward path)."""
    x = x.astype(jnp.float32)
    xn = x / jnp.maximum(jnp.linalg.norm(x, axis=1, keepdims=True), 1e-12)
    sim = jnp.exp((xn @ xn.T) / temperature)
    mask = (y[:, None] == y[None, :]).astype(jnp.float32)
    rel = relation_mat.astype(jnp.float32)[y][:, y]
    return -jnp.mean(jnp.log(jnp.sum(mask * sim, axis=1) /
                             jnp.sum(rel * sim, axis=1)))


if __name__ == "__main__":
    key = jax.random.PRNGKey(0)
    kx, ky = jax.random.split(key)

    N, D = 512, 32                       # batch, z_dim
    num_classes = 4
    temperature = 0.07
    # relation_class[i] = classes whose samples appear in the denominator for class i
    relation_class = {0: [0, 1], 1: [1, 2], 2: [2, 3], 3: [3, 0]}
    R = np.zeros((num_classes, num_classes), dtype=np.float32)
    for i, rels in relation_class.items():
        for c in rels:
            R[i, c] += 1.0
    R = jnp.asarray(R)

    x = jax.random.normal(kx, (N, D), dtype=jnp.float32)
    y = jax.random.randint(ky, (N,), 0, num_classes, dtype=jnp.int32)

    loss = supervised_contrastive_loss(x, y, R, temperature=temperature)
    loss = jax.block_until_ready(loss)

    ref = supervised_contrastive_loss_reference(x, y, R, temperature=temperature)
    assert loss.shape == ()
    assert jnp.allclose(loss, ref, atol=1e-4, rtol=1e-4), (
        f"loss {float(loss)} vs ref {float(ref)}")

    print("KERNEL_OK")
</pallas_src>

<mosaic_0001>
module attributes {stable_mosaic.version = 11 : i64} {
  func.func @_scl_kernel(%arg0: i32, %arg1: i32, %arg2: memref<256x32xf32, #tpu.memory_space<vmem>>, %arg3: memref<1x32x512xf32, #tpu.memory_space<vmem>>, %arg4: memref<1x512x8xf32, #tpu.memory_space<vmem>>, %arg5: memref<256x8xf32, #tpu.memory_space<vmem>>, %arg6: memref<256x8xf32, #tpu.memory_space<vmem>>, %arg7: memref<256x1xf32, #tpu.memory_space<vmem>>, %arg8: memref<256x8xf32, #tpu.memory_space<vmem>>) attributes {dimension_semantics = [#tpu.dimension_semantics<parallel>, #tpu.dimension_semantics<arbitrary>], iteration_bounds = array<i64: 2, 1>, scalar_prefetch = 0 : i64, scratch_operands = 1 : i64, tpu.core_type = #tpu.core_type<tc>, window_params = [{transform_indices = @transform_0, window_bounds = array<i64: 256, 32>}, {pipeline_mode = #tpu.pipeline_mode<synchronous>, transform_indices = @transform_1, window_bounds = array<i64: 1, 32, 512>}, {pipeline_mode = #tpu.pipeline_mode<synchronous>, transform_indices = @transform_2, window_bounds = array<i64: 1, 512, 8>}, {transform_indices = @transform_3, window_bounds = array<i64: 256, 8>}, {transform_indices = @transform_4, window_bounds = array<i64: 256, 8>}, {transform_indices = @transform_5, window_bounds = array<i64: 256, 1>}]} {
    %c0_i32 = arith.constant 0 : i32
    %0 = arith.cmpi eq, %arg1, %c0_i32 : i32
    %1 = arith.extui %0 : i1 to i32
    %c0_i32_0 = arith.constant 0 : i32
    %2 = arith.cmpi ne, %1, %c0_i32_0 : i32
    scf.if %2 {
      %cst_14 = arith.constant 0.000000e+00 : f32
      %21 = vector.broadcast %cst_14 : f32 to vector<256x8xf32>
      %c0_15 = arith.constant 0 : index
      %c0_16 = arith.constant 0 : index
      %22 = vector.load %arg8[%c0_15, %c0_16] : memref<256x8xf32, #tpu.memory_space<vmem>>, vector<256x8xf32>
      tpu.vector_store %arg8[%c0_15, %c0_16], %21 {strides = array<i32>} : memref<256x8xf32, #tpu.memory_space<vmem>>, vector<256x8xf32>,
    } else {
    }
    %3 = arith.index_cast %arg1 : i32 to index
    %c0 = arith.constant 0 : index
    %c0_1 = arith.constant 0 : index
    %4 = vector.load %arg3[%3, %c0, %c0_1] : memref<1x32x512xf32, #tpu.memory_space<vmem>>, vector<1x32x512xf32>
    %5 = vector.shape_cast %4 : vector<1x32x512xf32> to vector<32x512xf32>
    %6 = arith.index_cast %arg1 : i32 to index
    %c0_2 = arith.constant 0 : index
    %c0_3 = arith.constant 0 : index
    %7 = vector.load %arg4[%6, %c0_2, %c0_3] : memref<1x512x8xf32, #tpu.memory_space<vmem>>, vector<1x512x8xf32>
    %8 = vector.shape_cast %7 : vector<1x512x8xf32> to vector<512x8xf32>
    %c0_4 = arith.constant 0 : index
    %c0_5 = arith.constant 0 : index
    %9 = vector.load %arg2[%c0_4, %c0_5] : memref<256x32xf32, #tpu.memory_space<vmem>>, vector<256x32xf32>
    %cst = arith.constant dense<0.000000e+00> : vector<256x512xf32>
    %10 = tpu.matmul %9, %5, %cst {dimension_numbers = #tpu.dot_dimension_numbers<[1], [0], [0], [1], [0, 0, 1, 1], [], []>} : vector<256x32xf32>, vector<32x512xf32>, vector<256x512xf32> -> vector<256x512xf32>
    %cst_6 = arith.constant 14.2857141 : f32
    %11 = vector.broadcast %cst_6 : f32 to vector<256x512xf32>
    %12 = arith.subf %10, %11 : vector<256x512xf32>
    %13 = math.exp %12 : vector<256x512xf32>
    %c0_7 = arith.constant 0 : index
    %c0_8 = arith.constant 0 : index
    %14 = vector.load %arg8[%c0_7, %c0_8] : memref<256x8xf32, #tpu.memory_space<vmem>>, vector<256x8xf32>
    %cst_9 = arith.constant dense<0.000000e+00> : vector<256x8xf32>
    %15 = tpu.matmul %13, %8, %cst_9 {dimension_numbers = #tpu.dot_dimension_numbers<[1], [0], [0], [1], [0, 0, 1, 1], [], []>} : vector<256x512xf32>, vector<512x8xf32>, vector<256x8xf32> -> vector<256x8xf32>
    %16 = arith.addf %14, %15 : vector<256x8xf32>
    %c0_10 = arith.constant 0 : index
    %c0_11 = arith.constant 0 : index
    %17 = vector.load %arg8[%c0_10, %c0_11] : memref<256x8xf32, #tpu.memory_space<vmem>>, vector<256x8xf32>
    tpu.vector_store %arg8[%c0_10, %c0_11], %16 {strides = array<i32>} : memref<256x8xf32, #tpu.memory_space<vmem>>, vector<256x8xf32>,
    %c0_i32_12 = arith.constant 0 : i32
    %18 = arith.cmpi eq, %arg1, %c0_i32_12 : i32
    %19 = arith.extui %18 : i1 to i32
    %c0_i32_13 = arith.constant 0 : i32
    %20 = arith.cmpi ne, %19, %c0_i32_13 : i32
    scf.if %20 {
      %c0_14 = arith.constant 0 : index
      %c0_15 = arith.constant 0 : index
      %21 = vector.load %arg5[%c0_14, %c0_15] : memref<256x8xf32, #tpu.memory_space<vmem>>, vector<256x8xf32>
      %c0_16 = arith.constant 0 : index
      %c0_17 = arith.constant 0 : index
      %22 = vector.load %arg8[%c0_16, %c0_17] : memref<256x8xf32, #tpu.memory_space<vmem>>, vector<256x8xf32>
      %23 = arith.mulf %21, %22 : vector<256x8xf32>
      %cst_18 = arith.constant dense<0.000000e+00> : vector<256xf32>
      %24 = vector.multi_reduction <add>, %23, %cst_18 [1] : vector<256x8xf32> to vector<256xf32>
      %25 = vector.shape_cast %24 : vector<256xf32> to vector<256x1xf32>
      %c0_19 = arith.constant 0 : index
      %c0_20 = arith.constant 0 : index
      %26 = vector.load %arg6[%c0_19, %c0_20] : memref<256x8xf32, #tpu.memory_space<vmem>>, vector<256x8xf32>
      %c0_21 = arith.constant 0 : index
      %c0_22 = arith.constant 0 : index
      %27 = vector.load %arg8[%c0_21, %c0_22] : memref<256x8xf32, #tpu.memory_space<vmem>>, vector<256x8xf32>
      %28 = arith.mulf %26, %27 : vector<256x8xf32>
      %cst_23 = arith.constant dense<0.000000e+00> : vector<256xf32>
      %29 = vector.multi_reduction <add>, %28, %cst_23 [1] : vector<256x8xf32> to vector<256xf32>
      %30 = vector.shape_cast %29 : vector<256xf32> to vector<256x1xf32>
      %31 = math.log %25 : vector<256x1xf32>
      %32 = math.log %30 : vector<256x1xf32>
      %33 = arith.subf %31, %32 : vector<256x1xf32>
      %c0_24 = arith.constant 0 : index
      %c0_25 = arith.constant 0 : index
      %34 = vector.load %arg7[%c0_24, %c0_25] : memref<256x1xf32, #tpu.memory_space<vmem>>, vector<256x1xf32>
      tpu.vector_store %arg7[%c0_24, %c0_25], %33 {strides = array<i32>} : memref<256x1xf32, #tpu.memory_space<vmem>>, vector<256x1xf32>,
    } else {
    }
    return
  }
  func.func @transform_0(%arg0: i32, %arg1: i32) -> (i32, i32) {
    %c0_i32 = arith.constant 0 : i32
    %c0_i32_0 = arith.constant 0 : i32
    return %arg0, %c0_i32 : i32, i32
  }
  func.func @transform_1(%arg0: i32, %arg1: i32) -> (i32, i32, i32) {
    %c0_i32 = arith.constant 0 : i32
    %c0_i32_0 = arith.constant 0 : i32
    %c0_i32_1 = arith.constant 0 : i32
    %c0_i32_2 = arith.constant 0 : i32
    return %c0_i32, %c0_i32_0, %c0_i32_1 : i32, i32, i32
  }
  func.func @transform_2(%arg0: i32, %arg1: i32) -> (i32, i32, i32) {
    %c0_i32 = arith.constant 0 : i32
    %c0_i32_0 = arith.constant 0 : i32
    %c0_i32_1 = arith.constant 0 : i32
    %c0_i32_2 = arith.constant 0 : i32
    return %c0_i32, %c0_i32_0, %c0_i32_1 : i32, i32, i32
  }
  func.func @transform_3(%arg0: i32, %arg1: i32) -> (i32, i32) {
    %c0_i32 = arith.constant 0 : i32
    %c0_i32_0 = arith.constant 0 : i32
    return %arg0, %c0_i32 : i32, i32
  }
  func.func @transform_4(%arg0: i32, %arg1: i32) -> (i32, i32) {
    %c0_i32 = arith.constant 0 : i32
    %c0_i32_0 = arith.constant 0 : i32
    return %arg0, %c0_i32 : i32, i32
  }
  func.func @transform_5(%arg0: i32, %arg1: i32) -> (i32, i32) {
    %c0_i32 = arith.constant 0 : i32
    %c0_i32_0 = arith.constant 0 : i32
    return %arg0, %c0_i32 : i32, i32
  }
}

</mosaic_0001>

<llo_original>
// kernel: tpu_custom_call.1
$region0: #{tpu_custom_call.1}
  #allocation0 [shape = 'u32[]', space=smem, size = 0x4, offset = 0x4, fixed_abs, tag = 'smem constant byte address 0x4 - core index']
  #allocation1 [shape = 'u32[144,128]{1,0:T(1,128)}', space=vmem, size = 0x12000, scoped, tag = 'internal scratch']
  #allocation2 [shape = 'f32[256,8]{1,0:T(8,128)}', space=vmem, size = 0x20000, scoped, tag = 'scratch operand']
  %s0 = inlined_call_operand.vmem [shape: f32[512,32], index: 0, kind: input, shape index: {}]
  %s1 = inlined_call_operand.vmem [shape: f32[1,32,512], index: 1, kind: input, shape index: {}]
  %s2 = inlined_call_operand.vmem [shape: f32[1,512,8], index: 2, kind: input, shape index: {}]
  %s3 = inlined_call_operand.vmem [shape: f32[512,8], index: 3, kind: input, shape index: {}]
  %s4 = inlined_call_operand.vmem [shape: f32[512,8], index: 4, kind: input, shape index: {}]
  %s5 = inlined_call_operand.vmem [shape: f32[512,1], index: 5, kind: output, shape index: {}]
  %s6 = sld [smem:[#allocation0]]
  $region61: #{tpu_custom_call.1} parent=0
    _
  %s8 = ssub.s32 1, %s6
  %s9 = scalar_select 0, %s8, %s6
  loop: start=0, step=1, limit=4
  $region2: #{tpu_custom_call.1} parent=0 // loop_pre_header
    _
  $region3: #{tpu_custom_call.1} parent=0 // loop_header
    %s11 = sphi 0, %s15
    %p12 = scmp.ge.s32.totalorder %s11, 4
    %s18 = sphi 0, %s30
    %s19 = sphi 0, %s26
    %s20 = sphi 0, %s18
    %s21 = sphi 0, %s19
    %s22 = sphi 0, %s20
    %s23 = sphi 0, %s21
    %s33 = sphi 0, %s35
    %s36 = sphi 0, %s33
    %s37 = sphi 0, %s36
    %s53 = sphi 0, %s37
    %s57 = sphi 0, %s57
    %s59 = sphi 0, %s57
    %s60 = sphi 0, %s59
    %s74 = sphi 0, %s60
    %s78 = sphi 0, %s78
    %s80 = sphi 0, %s78
    %s81 = sphi 0, %s80
    %s95 = sphi 0, %s81
    %s101 = sphi 0, %s103
    %s104 = sphi 0, %s101
    %s105 = sphi 0, %s104
    %s121 = sphi 0, %s105
    %s127 = sphi 0, %s129
    %s130 = sphi 0, %s127
    %s131 = sphi 0, %s130
    %s147 = sphi 0, %s131
    %s153 = sphi 0, %s155
    %s156 = sphi 0, %s153
    %s157 = sphi 0, %s156
    %s173 = sphi 0, %s157
  $region4: #{tpu_custom_call.1} parent=0 // loop_header_branch
    %14 = sbr.rel (%p12) target = $region8
  $region5: #{tpu_custom_call.1} parent=0 // loop_body
    %s16 = ssub.s32 %s11, 1
    %s17 = ssub.s32 %s11, 2
    %s24 = sadd.s32 1, %s19
    %p25 = scmp.ge.s32.totalorder %s24, 1
    %s26 = scalar_select %p25, 0, %s24
    %s27 = sadd.s32 1, %s18
    %s28 = scalar_select %p25, %s27, %s18
    %p29 = scmp.ge.s32.totalorder %s28, 2
    %s30 = scalar_select %p29, 0, %s28
    %s31 = ssub.s32 %s18, %s30
    %p32 = scmp.eq.s32.totalorder %s31, 0
    %s34 = sadd.s32 %s33, 1
    %s35 = scalar_select %p32, %s33, %s34
    %p38 = pneg %p32
    %p39 = scmp.eq.s32.totalorder %s11, 1
    %p40 = por %p38, %p39
    %p41 = scmp.ne.s32.totalorder %s33, %s36
    %p42 = scmp.eq.s32.totalorder %s11, 0
    %p43 = por %p41, %p42
    %p44 = scmp.ne.s32.totalorder %s33, %s36
    %p45 = scmp.eq.s32.totalorder %s16, 1
    %p46 = por %p44, %p45
    %p47 = scmp.ne.s32.totalorder %s36, %s37
    %p48 = scmp.eq.s32.totalorder %s16, 0
    %p49 = por %p47, %p48
    %p50 = scmp.ne.s32.totalorder %s36, %s37
    %p51 = scmp.eq.s32.totalorder %s17, 1
    %p52 = por %p50, %p51
    %p54 = scmp.ne.s32.totalorder %s37, %s53
    %p55 = scmp.eq.s32.totalorder %s17, 0
    %p56 = por %p54, %p55
    %s58 = sadd.s32 %s57, 1
    %p61 = scmp.eq.s32.totalorder %s11, 1
    %p62 = scmp.ne.s32.totalorder %s57, %s59
    %p63 = scmp.eq.s32.totalorder %s11, 0
    %p64 = por %p62, %p63
    %p65 = scmp.ne.s32.totalorder %s57, %s59
    %p66 = scmp.eq.s32.totalorder %s16, 1
    %p67 = por %p65, %p66
    %p68 = scmp.ne.s32.totalorder %s59, %s60
    %p69 = scmp.eq.s32.totalorder %s16, 0
    %p70 = por %p68, %p69
    %p71 = scmp.ne.s32.totalorder %s59, %s60
    %p72 = scmp.eq.s32.totalorder %s17, 1
    %p73 = por %p71, %p72
    %p75 = scmp.ne.s32.totalorder %s60, %s74
    %p76 = scmp.eq.s32.totalorder %s17, 0
    %p77 = por %p75, %p76
    %s79 = sadd.s32 %s78, 1
    %p82 = scmp.eq.s32.totalorder %s11, 1
    %p83 = scmp.ne.s32.totalorder %s78, %s80
    %p84 = scmp.eq.s32.totalorder %s11, 0
    %p85 = por %p83, %p84
    %p86 = scmp.ne.s32.totalorder %s78, %s80
    %p87 = scmp.eq.s32.totalorder %s16, 1
    %p88 = por %p86, %p87
    %p89 = scmp.ne.s32.totalorder %s80, %s81
    %p90 = scmp.eq.s32.totalorder %s16, 0
    %p91 = por %p89, %p90
    %p92 = scmp.ne.s32.totalorder %s80, %s81
    %p93 = scmp.eq.s32.totalorder %s17, 1
    %p94 = por %p92, %p93
    %p96 = scmp.ne.s32.totalorder %s81, %s95
    %p97 = scmp.eq.s32.totalorder %s17, 0
    %p98 = por %p96, %p97
    %s99 = ssub.s32 %s18, %s30
    %p100 = scmp.eq.s32.totalorder %s99, 0
    %s102 = sadd.s32 %s101, 1
    %s103 = scalar_select %p100, %s101, %s102
    %p106 = pneg %p100
    %p107 = scmp.eq.s32.totalorder %s11, 1
    %p108 = por %p106, %p107
    %p109 = scmp.ne.s32.totalorder %s101, %s104
    %p110 = scmp.eq.s32.totalorder %s11, 0
    %p111 = por %p109, %p110
    %p112 = scmp.ne.s32.totalorder %s101, %s104
    %p113 = scmp.eq.s32.totalorder %s16, 1
    %p114 = por %p112, %p113
    %p115 = scmp.ne.s32.totalorder %s104, %s105
    %p116 = scmp.eq.s32.totalorder %s16, 0
    %p117 = por %p115, %p116
    %p118 = scmp.ne.s32.totalorder %s104, %s105
    %p119 = scmp.eq.s32.totalorder %s17, 1
    %p120 = por %p118, %p119
    %p122 = scmp.ne.s32.totalorder %s105, %s121
    %p123 = scmp.eq.s32.totalorder %s17, 0
    %p124 = por %p122, %p123
    %s125 = ssub.s32 %s18, %s30
    %p126 = scmp.eq.s32.totalorder %s125, 0
    %s128 = sadd.s32 %s127, 1
    %s129 = scalar_select %p126, %s127, %s128
    %p132 = pneg %p126
    %p133 = scmp.eq.s32.totalorder %s11, 1
    %p134 = por %p132, %p133
    %p135 = scmp.ne.s32.totalorder %s127, %s130
    %p136 = scmp.eq.s32.totalorder %s11, 0
    %p137 = por %p135, %p136
    %p138 = scmp.ne.s32.totalorder %s127, %s130
    %p139 = scmp.eq.s32.totalorder %s16, 1
    %p140 = por %p138, %p139
    %p141 = scmp.ne.s32.totalorder %s130, %s131
    %p142 = scmp.eq.s32.totalorder %s16, 0
    %p143 = por %p141, %p142
    %p144 = scmp.ne.s32.totalorder %s130, %s131
    %p145 = scmp.eq.s32.totalorder %s17, 1
    %p146 = por %p144, %p145
    %p148 = scmp.ne.s32.totalorder %s131, %s147
    %p149 = scmp.eq.s32.totalorder %s17, 0
    %p150 = por %p148, %p149
    %s151 = ssub.s32 %s18, %s30
    %p152 = scmp.eq.s32.totalorder %s151, 0
    %s154 = sadd.s32 %s153, 1
    %s155 = scalar_select %p152, %s153, %s154
    %p158 = pneg %p152
    %p159 = scmp.eq.s32.totalorder %s11, 1
    %p160 = por %p158, %p159
    %p161 = scmp.ne.s32.totalorder %s153, %s156
    %p162 = scmp.eq.s32.totalorder %s11, 0
    %p163 = por %p161, %p162
    %p164 = scmp.ne.s32.totalorder %s153, %s156
    %p165 = scmp.eq.s32.totalorder %s16, 1
    %p166 = por %p164, %p165
    %p167 = scmp.ne.s32.totalorder %s156, %s157
    %p168 = scmp.eq.s32.totalorder %s16, 0
    %p169 = por %p167, %p168
    %p170 = scmp.ne.s32.totalorder %s156, %s157
    %p171 = scmp.eq.s32.totalorder %s17, 1
    %p172 = por %p170, %p171
    %p174 = scmp.ne.s32.totalorder %s157, %s173
    %p175 = scmp.eq.s32.totalorder %s17, 0
    %p176 = por %p174, %p175
    %p177 = scmp.le.s32.totalorder 1, %s11
    %p178 = scmp.lt.s32.totalorder %s11, 3
    %p179 = pnand %p177, %p178
    %p180 = pneg %p179
    // Predicated region
    $region9: #{tpu_custom_call.1} parent=5 // pred_check
      _
    $region10: #{tpu_custom_call.1} parent=5 // pred_check_branch
      %182 = sbr.rel (%p179) target = $region12
    $region11: #{tpu_custom_call.1} parent=5 // pred_region
      %s183 = ssub.s32 %s11, 1
      // Predicated region
      $region13: #{tpu_custom_call.1} parent=11 // pred_check
        %p184 = pneg %p70
      $region14: #{tpu_custom_call.1} parent=11 // pred_check_branch
        %186 = sbr.rel (%p184) target = $region16
      $region15: #{tpu_custom_call.1} parent=11 // pred_region
        _
      $region16: #{tpu_custom_call.1} parent=11 // pred_fallthru
        _
      // Predicated region
      $region17: #{tpu_custom_call.1} parent=11 // pred_check
        %p187 = pneg %p91
      $region18: #{tpu_custom_call.1} parent=11 // pred_check_branch
        %189 = sbr.rel (%p187) target = $region20
      $region19: #{tpu_custom_call.1} parent=11 // pred_region
        _
      $region20: #{tpu_custom_call.1} parent=11 // pred_fallthru
        _
    $region12: #{tpu_custom_call.1} parent=5 // pred_fallthru
      _
    %p190 = scmp.lt.s32.totalorder %s11, 2
    // Predicated region
    $region21: #{tpu_custom_call.1} parent=5 // pred_check
      %p191 = pneg %p190
    $region22: #{tpu_custom_call.1} parent=5 // pred_check_branch
      %193 = sbr.rel (%p191) target = $region24
    $region23: #{tpu_custom_call.1} parent=5 // pred_region
      // Predicated region
      $region25: #{tpu_custom_call.1} parent=23 // pred_check
        %p194 = pneg %p43
      $region26: #{tpu_custom_call.1} parent=23 // pred_check_branch
        %196 = sbr.rel (%p194) target = $region28
      $region27: #{tpu_custom_call.1} parent=23 // pred_region
        %s197 = smul.u32 32, %s18
        %p198 = scmp.lt.s32.totalorder %s197, 63
        %s199 = scalar_select %p198, %s197, 63
        %s200 = smul.addr %s199, 8
        %s201 = scalar_lea.vmem %s0, %s200
        %s202 = smul.u32 32, %s18
      $region28: #{tpu_custom_call.1} parent=23 // pred_fallthru
        _
      // Predicated region
      $region29: #{tpu_custom_call.1} parent=23 // pred_check
        %p203 = pneg %p111
      $region30: #{tpu_custom_call.1} parent=23 // pred_check_branch
        %205 = sbr.rel (%p203) target = $region32
      $region31: #{tpu_custom_call.1} parent=23 // pred_region
        %s206 = smul.u32 32, %s18
        %p207 = scmp.lt.s32.totalorder %s206, 63
        %s208 = scalar_select %p207, %s206, 63
        %s209 = smul.addr %s208, 8
        %s210 = scalar_lea.vmem %s3, %s209
        %s211 = smul.u32 32, %s18
      $region32: #{tpu_custom_call.1} parent=23 // pred_fallthru
        _
      // Predicated region
      $region33: #{tpu_custom_call.1} parent=23 // pred_check
        %p212 = pneg %p137
      $region34: #{tpu_custom_call.1} parent=23 // pred_check_branch
        %214 = sbr.rel (%p212) target = $region36
      $region35: #{tpu_custom_call.1} parent=23 // pred_region
        %s215 = smul.u32 32, %s18
        %p216 = scmp.lt.s32.totalorder %s215, 63
        %s217 = scalar_select %p216, %s215, 63
        %s218 = smul.addr %s217, 8
        %s219 = scalar_lea.vmem %s4, %s218
        %s220 = smul.u32 32, %s18
      $region36: #{tpu_custom_call.1} parent=23 // pred_fallthru
        _
    $region24: #{tpu_custom_call.1} parent=5 // pred_fallthru
      _
    %p221 = scmp.le.s32.totalorder 1, %s11
    %p222 = scmp.lt.s32.totalorder %s11, 3
    %p223 = pnand %p221, %p222
    %p224 = pneg %p223
    // Predicated region
    $region37: #{tpu_custom_call.1} parent=5 // pred_check
      _
    $region38: #{tpu_custom_call.1} parent=5 // pred_check_branch
      %226 = sbr.rel (%p223) target = $region40
    $region39: #{tpu_custom_call.1} parent=5 // pred_region
      %s227 = ssub.s32 %s11, 1
      %s228 = smul.u32 32, %s20
      %p229 = scmp.lt.s32.totalorder %s228, 63
      %s230 = scalar_select %p229, %s228, 63
      %s231 = smul.addr %s230, 8
      %s232 = scalar_lea.vmem %s0, %s231
      %p233 = pneg %p49
      %p234 = pneg %p46
      %p235 = pneg %p70
      %p236 = pneg %p67
      %p237 = pneg %p91
      %p238 = pneg %p88
      %s239 = smul.u32 32, %s20
      %p240 = scmp.lt.s32.totalorder %s239, 63
      %s241 = scalar_select %p240, %s239, 63
      %s242 = smul.addr %s241, 8
      %s243 = scalar_lea.vmem %s3, %s242
      %p244 = pneg %p117
      %p245 = pneg %p114
      %s246 = smul.u32 32, %s20
      %p247 = scmp.lt.s32.totalorder %s246, 63
      %s248 = scalar_select %p247, %s246, 63
      %s249 = smul.addr %s248, 8
      %s250 = scalar_lea.vmem %s4, %s249
      %p251 = pneg %p143
      %p252 = pneg %p140
      %p253 = pneg %p169
      %p254 = pneg %p166
      %s255 = smul.u32 32, %s20
      %p256 = scmp.lt.s32.totalorder %s255, 63
      %s257 = scalar_select %p256, %s255, 63
      %s258 = smul.addr %s257, 8
      %s259 = scalar_lea.vmem %s5, %s258
      %s260 = smul.u32 32, %s20
      %p261 = scmp.lt.s32.totalorder %s260, 63
      %s262 = scalar_select %p261, %s260, 63
      %s263 = smul.addr %s262, 8
      %s264 = scalar_lea.vmem %s0, %s263
      %s265 = smul.u32 32, %s20
      %s266 = smul.u32 32, %s20
      %p267 = scmp.lt.s32.totalorder %s266, 63
      %s268 = scalar_select %p267, %s266, 63
      %s269 = smul.addr %s268, 8
      %s270 = scalar_lea.vmem %s3, %s269
      %s271 = smul.u32 32, %s20
      %s272 = smul.u32 32, %s20
      %p273 = scmp.lt.s32.totalorder %s272, 63
      %s274 = scalar_select %p273, %s272, 63
      %s275 = smul.addr %s274, 8
      %s276 = scalar_lea.vmem %s4, %s275
      %s277 = smul.u32 32, %s20
      %s278 = smul.u32 32, %s20
      %p279 = scmp.lt.s32.totalorder %s278, 63
      %s280 = scalar_select %p279, %s278, 63
      %s281 = smul.addr %s280, 8
      %s282 = scalar_lea.vmem %s5, %s281
      %s283 = smul.u32 32, %s20
      %p284 = scmp.eq.s32.totalorder %s21, 0
      // Predicated region
      $region41: #{tpu_custom_call.1} parent=39 // pred_check
        %p285 = pneg %p284
      $region42: #{tpu_custom_call.1} parent=39 // pred_check_branch
        %287 = sbr.rel (%p285) target = $region44
      $region43: #{tpu_custom_call.1} parent=39 // pred_region
        %vm288 = vcmask 64512
        %289 = vst.msk [vmem:[#allocation2] sm:$0xff] %vm288, 0.0
        %290 = vst.msk [vmem:[#allocation2 + $0x8] sm:$0xff] %vm288, 0.0
        %291 = vst.msk [vmem:[#allocation2 + $0x10] sm:$0xff] %vm288, 0.0
        %292 = vst.msk [vmem:[#allocation2 + $0x18] sm:$0xff] %vm288, 0.0
        %293 = vst.msk [vmem:[#allocation2 + $0x20] sm:$0xff] %vm288, 0.0
        %294 = vst.msk [vmem:[#allocation2 + $0x28] sm:$0xff] %vm288, 0.0
        %295 = vst.msk [vmem:[#allocation2 + $0x30] sm:$0xff] %vm288, 0.0
        %296 = vst.msk [vmem:[#allocation2 + $0x38] sm:$0xff] %vm288, 0.0
        %297 = vst.msk [vmem:[#allocation2 + $0x40] sm:$0xff] %vm288, 0.0
        %298 = vst.msk [vmem:[#allocation2 + $0x48] sm:$0xff] %vm288, 0.0
        %299 = vst.msk [vmem:[#allocation2 + $0x50] sm:$0xff] %vm288, 0.0
        %300 = vst.msk [vmem:[#allocation2 + $0x58] sm:$0xff] %vm288, 0.0
        %301 = vst.msk [vmem:[#allocation2 + $0x60] sm:$0xff] %vm288, 0.0
        %302 = vst.msk [vmem:[#allocation2 + $0x68] sm:$0xff] %vm288, 0.0
        %303 = vst.msk [vmem:[#allocation2 + $0x70] sm:$0xff] %vm288, 0.0
        %304 = vst.msk [vmem:[#allocation2 + $0x78] sm:$0xff] %vm288, 0.0
        %305 = vst.msk [vmem:[#allocation2 + $0x80] sm:$0xff] %vm288, 0.0
        %306 = vst.msk [vmem:[#allocation2 + $0x88] sm:$0xff] %vm288, 0.0
        %307 = vst.msk [vmem:[#allocation2 + $0x90] sm:$0xff] %vm288, 0.0
        %308 = vst.msk [vmem:[#allocation2 + $0x98] sm:$0xff] %vm288, 0.0
        %309 = vst.msk [vmem:[#allocation2 + $0xa0] sm:$0xff] %vm288, 0.0
        %310 = vst.msk [vmem:[#allocation2 + $0xa8] sm:$0xff] %vm288, 0.0
        %311 = vst.msk [vmem:[#allocation2 + $0xb0] sm:$0xff] %vm288, 0.0
        %312 = vst.msk [vmem:[#allocation2 + $0xb8] sm:$0xff] %vm288, 0.0
        %313 = vst.msk [vmem:[#allocation2 + $0xc0] sm:$0xff] %vm288, 0.0
        %314 = vst.msk [vmem:[#allocation2 + $0xc8] sm:$0xff] %vm288, 0.0
        %315 = vst.msk [vmem:[#allocation2 + $0xd0] sm:$0xff] %vm288, 0.0
        %316 = vst.msk [vmem:[#allocation2 + $0xd8] sm:$0xff] %vm288, 0.0
        %317 = vst.msk [vmem:[#allocation2 + $0xe0] sm:$0xff] %vm288, 0.0
        %318 = vst.msk [vmem:[#allocation2 + $0xe8] sm:$0xff] %vm288, 0.0
        %319 = vst.msk [vmem:[#allocation2 + $0xf0] sm:$0xff] %vm288, 0.0
        %320 = vst.msk [vmem:[#allocation2 + $0xf8] sm:$0xff] %vm288, 0.0
      $region44: #{tpu_custom_call.1} parent=39 // pred_fallthru
        _
      %s321 = smul.u32 %s21, 16
      %s322 = smul.addr %s321, 8
      %s323 = scalar_lea.vmem %s1, %s322
      %v324 = vld [vmem:[%s323] sm:$0xff]
      %v325 = vld [vmem:[%s323 + $0x8] sm:$0xff]
      %v326 = vld [vmem:[%s323 + $0x10] sm:$0xff]
      %v327 = vld [vmem:[%s323 + $0x18] sm:$0xff]
      %v328 = vld [vmem:[%s323 + $0x20] sm:$0xff]
      %v329 = vld [vmem:[%s323 + $0x28] sm:$0xff]
      %v330 = vld [vmem:[%s323 + $0x30] sm:$0xff]
      %v331 = vld [vmem:[%s323 + $0x38] sm:$0xff]
      %v332 = vld [vmem:[%s323 + $0x40] sm:$0xff]
      %v333 = vld [vmem:[%s323 + $0x48] sm:$0xff]
      %v334 = vld [vmem:[%s323 + $0x50] sm:$0xff]
      %v335 = vld [vmem:[%s323 + $0x58] sm:$0xff]
      %v336 = vld [vmem:[%s323 + $0x60] sm:$0xff]
      %v337 = vld [vmem:[%s323 + $0x68] sm:$0xff]
      %v338 = vld [vmem:[%s323 + $0x70] sm:$0xff]
      %v339 = vld [vmem:[%s323 + $0x78] sm:$0xff]
      %s340 = smul.u32 %s21, 512
      %s341 = scalar_lea.vmem %s2, %s340
      %v342 = vld [vmem:[%s341] sm:$0xff]
      %v343 = vld [vmem:[%s341 + $0x8] sm:$0xff]
      %v344 = vld [vmem:[%s341 + $0x10] sm:$0xff]
      %v345 = vld [vmem:[%s341 + $0x18] sm:$0xff]
      %v346 = vld [vmem:[%s341 + $0x20] sm:$0xff]
      %v347 = vld [vmem:[%s341 + $0x28] sm:$0xff]
      %v348 = vld [vmem:[%s341 + $0x30] sm:$0xff]
      %v349 = vld [vmem:[%s341 + $0x38] sm:$0xff]
      %v350 = vld [vmem:[%s341 + $0x40] sm:$0xff]
      %v351 = vld [vmem:[%s341 + $0x48] sm:$0xff]
      %v352 = vld [vmem:[%s341 + $0x50] sm:$0xff]
      %v353 = vld [vmem:[%s341 + $0x58] sm:$0xff]
      %v354 = vld [vmem:[%s341 + $0x60] sm:$0xff]
      %v355 = vld [vmem:[%s341 + $0x68] sm:$0xff]
      %v356 = vld [vmem:[%s341 + $0x70] sm:$0xff]
      %v357 = vld [vmem:[%s341 + $0x78] sm:$0xff]
      %v358 = vld [vmem:[%s341 + $0x80] sm:$0xff]
      %v359 = vld [vmem:[%s341 + $0x88] sm:$0xff]
      %v360 = vld [vmem:[%s341 + $0x90] sm:$0xff]
      %v361 = vld [vmem:[%s341 + $0x98] sm:$0xff]
      %v362 = vld [vmem:[%s341 + $0xa0] sm:$0xff]
      %v363 = vld [vmem:[%s341 + $0xa8] sm:$0xff]
      %v364 = vld [vmem:[%s341 + $0xb0] sm:$0xff]
      %v365 = vld [vmem:[%s341 + $0xb8] sm:$0xff]
      %v366 = vld [vmem:[%s341 + $0xc0] sm:$0xff]
      %v367 = vld [vmem:[%s341 + $0xc8] sm:$0xff]
      %v368 = vld [vmem:[%s341 + $0xd0] sm:$0xff]
      %v369 = vld [vmem:[%s341 + $0xd8] sm:$0xff]
      %v370 = vld [vmem:[%s341 + $0xe0] sm:$0xff]
      %v371 = vld [vmem:[%s341 + $0xe8] sm:$0xff]
      %v372 = vld [vmem:[%s341 + $0xf0] sm:$0xff]
      %v373 = vld [vmem:[%s341 + $0xf8] sm:$0xff]
      %v374 = vld [vmem:[%s341 + $0x100] sm:$0xff]
      %v375 = vld [vmem:[%s341 + $0x108] sm:$0xff]
      %v376 = vld [vmem:[%s341 + $0x110] sm:$0xff]
      %v377 = vld [vmem:[%s341 + $0x118] sm:$0xff]
      %v378 = vld [vmem:[%s341 + $0x120] sm:$0xff]
      %v379 = vld [vmem:[%s341 + $0x128] sm:$0xff]
      %v380 = vld [vmem:[%s341 + $0x130] sm:$0xff]
      %v381 = vld [vmem:[%s341 + $0x138] sm:$0xff]
      %v382 = vld [vmem:[%s341 + $0x140] sm:$0xff]
      %v383 = vld [vmem:[%s341 + $0x148] sm:$0xff]
      %v384 = vld [vmem:[%s341 + $0x150] sm:$0xff]
      %v385 = vld [vmem:[%s341 + $0x158] sm:$0xff]
      %v386 = vld [vmem:[%s341 + $0x160] sm:$0xff]
      %v387 = vld [vmem:[%s341 + $0x168] sm:$0xff]
      %v388 = vld [vmem:[%s341 + $0x170] sm:$0xff]
      %v389 = vld [vmem:[%s341 + $0x178] sm:$0xff]
      %v390 = vld [vmem:[%s341 + $0x180] sm:$0xff]
      %v391 = vld [vmem:[%s341 + $0x188] sm:$0xff]
      %v392 = vld [vmem:[%s341 + $0x190] sm:$0xff]
      %v393 = vld [vmem:[%s341 + $0x198] sm:$0xff]
      %v394 = vld [vmem:[%s341 + $0x1a0] sm:$0xff]
      %v395 = vld [vmem:[%s341 + $0x1a8] sm:$0xff]
      %v396 = vld [vmem:[%s341 + $0x1b0] sm:$0xff]
      %v397 = vld [vmem:[%s341 + $0x1b8] sm:$0xff]
      %v398 = vld [vmem:[%s341 + $0x1c0] sm:$0xff]
      %v399 = vld [vmem:[%s341 + $0x1c8] sm:$0xff]
      %v400 = vld [vmem:[%s341 + $0x1d0] sm:$0xff]
      %v401 = vld [vmem:[%s341 + $0x1d8] sm:$0xff]
      %v402 = vld [vmem:[%s341 + $0x1e0] sm:$0xff]
      %v403 = vld [vmem:[%s341 + $0x1e8] sm:$0xff]
      %v404 = vld [vmem:[%s341 + $0x1f0] sm:$0xff]
      %v405 = vld [vmem:[%s341 + $0x1f8] sm:$0xff]
      %v406 = vld [vmem:[%s264] sm:$0xff]
      %v407 = vld [vmem:[%s264 + $0x8] sm:$0xff]
      %v408 = vld [vmem:[%s264 + $0x10] sm:$0xff]
      %v409 = vld [vmem:[%s264 + $0x18] sm:$0xff]
      %v410 = vld [vmem:[%s264 + $0x20] sm:$0xff]
      %v411 = vld [vmem:[%s264 + $0x28] sm:$0xff]
      %v412 = vld [vmem:[%s264 + $0x30] sm:$0xff]
      %v413 = vld [vmem:[%s264 + $0x38] sm:$0xff]
      %v414 = vld [vmem:[%s264 + $0x40] sm:$0xff]
      %v415 = vld [vmem:[%s264 + $0x48] sm:$0xff]
      %v416 = vld [vmem:[%s264 + $0x50] sm:$0xff]
      %v417 = vld [vmem:[%s264 + $0x58] sm:$0xff]
      %v418 = vld [vmem:[%s264 + $0x60] sm:$0xff]
      %v419 = vld [vmem:[%s264 + $0x68] sm:$0xff]
      %v420 = vld [vmem:[%s264 + $0x70] sm:$0xff]
      %v421 = vld [vmem:[%s264 + $0x78] sm:$0xff]
      %v422 = vld [vmem:[%s264 + $0x80] sm:$0xff]
      %v423 = vld [vmem:[%s264 + $0x88] sm:$0xff]
      %v424 = vld [vmem:[%s264 + $0x90] sm:$0xff]
      %v425 = vld [vmem:[%s264 + $0x98] sm:$0xff]
      %v426 = vld [vmem:[%s264 + $0xa0] sm:$0xff]
      %v427 = vld [vmem:[%s264 + $0xa8] sm:$0xff]
      %v428 = vld [vmem:[%s264 + $0xb0] sm:$0xff]
      %v429 = vld [vmem:[%s264 + $0xb8] sm:$0xff]
      %v430 = vld [vmem:[%s264 + $0xc0] sm:$0xff]
      %v431 = vld [vmem:[%s264 + $0xc8] sm:$0xff]
      %v432 = vld [vmem:[%s264 + $0xd0] sm:$0xff]
      %v433 = vld [vmem:[%s264 + $0xd8] sm:$0xff]
      %v434 = vld [vmem:[%s264 + $0xe0] sm:$0xff]
      %v435 = vld [vmem:[%s264 + $0xe8] sm:$0xff]
      %v436 = vld [vmem:[%s264 + $0xf0] sm:$0xff]
      %v437 = vld [vmem:[%s264 + $0xf8] sm:$0xff]
      %vm438 = vcmask 261120
      %v440 = vsel %vm438, %v406, 0
      %v443 = vsel %vm438, %v407, 0
      %v446 = vsel %vm438, %v408, 0
      %v449 = vsel %vm438, %v409, 0
      %v452 = vsel %vm438, %v410, 0
      %v455 = vsel %vm438, %v411, 0
      %v458 = vsel %vm438, %v412, 0
      %v461 = vsel %vm438, %v413, 0
      %v464 = vsel %vm438, %v414, 0
      %v467 = vsel %vm438, %v415, 0
      %v470 = vsel %vm438, %v416, 0
      %v473 = vsel %vm438, %v417, 0
      %v476 = vsel %vm438, %v418, 0
      %v479 = vsel %vm438, %v419, 0
      %v482 = vsel %vm438, %v420, 0
      %v485 = vsel %vm438, %v421, 0
      %v488 = vsel %vm438, %v422, 0
      %v491 = vsel %vm438, %v423, 0
      %v494 = vsel %vm438, %v424, 0
      %v497 = vsel %vm438, %v425, 0
      %v500 = vsel %vm438, %v426, 0
      %v503 = vsel %vm438, %v427, 0
      %v506 = vsel %vm438, %v428, 0
      %v509 = vsel %vm438, %v429, 0
      %v512 = vsel %vm438, %v430, 0
      %v515 = vsel %vm438, %v431, 0
      %v518 = vsel %vm438, %v432, 0
      %v521 = vsel %vm438, %v433, 0
      %v524 = vsel %vm438, %v434, 0
      %v527 = vsel %vm438, %v435, 0
      %v530 = vsel %vm438, %v436, 0
      %v533 = vsel %vm438, %v437, 0
      %535 = vmatprep.subr.mxu0 0.0
      %536 = vmatpush1.msra.mxu0 0.0
      %537 = vmatprep.subr.mxu0 0.0
      %538 = vmatpush1.msra.mxu0 0.0
      %539 = vmatprep.subr.mxu0 0.0
      %540 = vmatpush1.msra.mxu0 0.0
      %541 = vmatprep.subr.mxu0 0.0
      %542 = vmatpush1.msra.mxu0 0.0
      %543 = vmatprep.subr.mxu0 0.0
      %544 = vmatpush1.msra.mxu0 0.0
      %545 = vmatprep.subr.mxu0 0.0
      %546 = vmatpush1.msra.mxu0 0.0
      %547 = vmatprep.subr.mxu0 0.0
      %548 = vmatpush1.msra.mxu0 0.0
      %549 = vmatprep.subr.mxu0 0.0
      %550 = vmatpush1.msra.mxu0 0.0
      %551 = vmatprep.subr.mxu0 0.0
      %552 = vmatpush1.msra.mxu0 0.0
      %553 = vmatprep.subr.mxu0 0.0
      %554 = vmatpush1.msra.mxu0 0.0
      %555 = vmatprep.subr.mxu0 0.0
      %556 = vmatpush1.msra.mxu0 0.0
      %557 = vmatprep.subr.mxu0 0.0
      %558 = vmatpush1.msra.mxu0 0.0
      %559 = vmatprep.subr.mxu0 %v337
      %560 = vmatpush1.msra.mxu0 %v336
      %561 = vmatprep.subr.mxu0 %v333
      %562 = vmatpush1.msra.mxu0 %v332
      %563 = vmatprep.subr.mxu0 %v329
      %564 = vmatpush1.msra.mxu0 %v328
      %565 = vmatprep.subr.mxu0 %v325
      %566 = vmatpush1.msra.mxu0 %v324
      %567 = vmatprep.subr.mxu0 0.0
      %568 = vmatpush2.msra.mxu0 0.0
      %569 = vmatprep.subr.mxu0 0.0
      %570 = vmatpush2.msra.mxu0 0.0
      %571 = vmatprep.subr.mxu0 0.0
      %572 = vmatpush2.msra.mxu0 0.0
      %573 = vmatprep.subr.mxu0 0.0
      %574 = vmatpush2.msra.mxu0 0.0
      %575 = vmatprep.subr.mxu0 0.0
      %576 = vmatpush2.msra.mxu0 0.0
      %577 = vmatprep.subr.mxu0 0.0
      %578 = vmatpush2.msra.mxu0 0.0
      %579 = vmatprep.subr.mxu0 0.0
      %580 = vmatpush2.msra.mxu0 0.0
      %581 = vmatprep.subr.mxu0 0.0
      %582 = vmatpush2.msra.mxu0 0.0
      %583 = vmatprep.subr.mxu0 0.0
      %584 = vmatpush2.msra.mxu0 0.0
      %585 = vmatprep.subr.mxu0 0.0
      %586 = vmatpush2.msra.mxu0 0.0
      %587 = vmatprep.subr.mxu0 0.0
      %588 = vmatpush2.msra.mxu0 0.0
      %589 = vmatprep.subr.mxu0 0.0
      %590 = vmatpush2.msra.mxu0 0.0
      %591 = vmatprep.subr.mxu0 0.0
      %592 = vmatpush2.msra.mxu0 0.0
      %593 = vmatprep.subr.mxu0 0.0
      %594 = vmatpush2.msra.mxu0 0.0
      %595 = vmatprep.subr.mxu0 0.0
      %596 = vmatpush2.msra.mxu0 0.0
      %597 = vmatprep.subr.mxu0 0.0
      %598 = vmatpush2.msra.mxu0 0.0
      %599 = vmatprep.mubr.f32.mxu0 0.0
      %600 = vmatmul.mubr.f32.gmra.mxu0 %v440
      %v601 = vpop.f32.mrf.mxu0
      %v602 = vadd.f32 0.0, %v601
      %v603 = vpop.f32.mrf.mxu0
      %v604 = vadd.f32 0.0, %v603
      %605 = vmatprep.mubr.f32.mxu0 0.0
      %606 = vmatmul.mubr.f32.gmra.mxu0 %v443
      %v607 = vpop.f32.mrf.mxu0
      %v608 = vadd.f32 0.0, %v607
      %v609 = vpop.f32.mrf.mxu0
      %v610 = vadd.f32 0.0, %v609
      %611 = vmatprep.mubr.f32.mxu0 0.0
      %612 = vmatmul.mubr.f32.gmra.mxu0 %v446
      %v613 = vpop.f32.mrf.mxu0
      %v614 = vadd.f32 0.0, %v613
      %v615 = vpop.f32.mrf.mxu0
      %v616 = vadd.f32 0.0, %v615
      %617 = vmatprep.mubr.f32.mxu0 0.0
      %618 = vmatmul.mubr.f32.gmra.mxu0 %v449
      %v619 = vpop.f32.mrf.mxu0
      %v620 = vadd.f32 0.0, %v619
      %v621 = vpop.f32.mrf.mxu0
      %v622 = vadd.f32 0.0, %v621
      %623 = vmatprep.mubr.f32.mxu0 0.0
      %624 = vmatmul.mubr.f32.gmra.mxu0 %v452
      %v625 = vpop.f32.mrf.mxu0
      %v626 = vadd.f32 0.0, %v625
      %v627 = vpop.f32.mrf.mxu0
      %v628 = vadd.f32 0.0, %v627
      %629 = vmatprep.mubr.f32.mxu0 0.0
      %630 = vmatmul.mubr.f32.gmra.mxu0 %v455
      %v631 = vpop.f32.mrf.mxu0
      %v632 = vadd.f32 0.0, %v631
      %v633 = vpop.f32.mrf.mxu0
      %v634 = vadd.f32 0.0, %v633
      %635 = vmatprep.mubr.f32.mxu0 0.0
      %636 = vmatmul.mubr.f32.gmra.mxu0 %v458
      %v637 = vpop.f32.mrf.mxu0
      %v638 = vadd.f32 0.0, %v637
      %v639 = vpop.f32.mrf.mxu0
      %v640 = vadd.f32 0.0, %v639
      %641 = vmatprep.mubr.f32.mxu0 0.0
      %642 = vmatmul.mubr.f32.gmra.mxu0 %v461
      %v643 = vpop.f32.mrf.mxu0
      %v644 = vadd.f32 0.0, %v643
      %v645 = vpop.f32.mrf.mxu0
      %v646 = vadd.f32 0.0, %v645
      %647 = vmatprep.mubr.f32.mxu0 0.0
      %648 = vmatmul.mubr.f32.gmra.mxu0 %v464
      %v649 = vpop.f32.mrf.mxu0
      %v650 = vadd.f32 0.0, %v649
      %v651 = vpop.f32.mrf.mxu0
      %v652 = vadd.f32 0.0, %v651
      %653 = vmatprep.mubr.f32.mxu0 0.0
      %654 = vmatmul.mubr.f32.gmra.mxu0 %v467
      %v655 = vpop.f32.mrf.mxu0
      %v656 = vadd.f32 0.0, %v655
      %v657 = vpop.f32.mrf.mxu0
      %v658 = vadd.f32 0.0, %v657
      %659 = vmatprep.mubr.f32.mxu0 0.0
      %660 = vmatmul.mubr.f32.gmra.mxu0 %v470
      %v661 = vpop.f32.mrf.mxu0
      %v662 = vadd.f32 0.0, %v661
      %v663 = vpop.f32.mrf.mxu0
      %v664 = vadd.f32 0.0, %v663
      %665 = vmatprep.mubr.f32.mxu0 0.0
      %666 = vmatmul.mubr.f32.gmra.mxu0 %v473
      %v667 = vpop.f32.mrf.mxu0
      %v668 = vadd.f32 0.0, %v667
      %v669 = vpop.f32.mrf.mxu0
      %v670 = vadd.f32 0.0, %v669
      %671 = vmatprep.mubr.f32.mxu0 0.0
      %672 = vmatmul.mubr.f32.gmra.mxu0 %v476
      %v673 = vpop.f32.mrf.mxu0
      %v674 = vadd.f32 0.0, %v673
      %v675 = vpop.f32.mrf.mxu0
      %v676 = vadd.f32 0.0, %v675
      %677 = vmatprep.mubr.f32.mxu0 0.0
      %678 = vmatmul.mubr.f32.gmra.mxu0 %v479
      %v679 = vpop.f32.mrf.mxu0
      %v680 = vadd.f32 0.0, %v679
      %v681 = vpop.f32.mrf.mxu0
      %v682 = vadd.f32 0.0, %v681
      %683 = vmatprep.mubr.f32.mxu0 0.0
      %684 = vmatmul.mubr.f32.gmra.mxu0 %v482
      %v685 = vpop.f32.mrf.mxu0
      %v686 = vadd.f32 0.0, %v685
      %v687 = vpop.f32.mrf.mxu0
      %v688 = vadd.f32 0.0, %v687
      %689 = vmatprep.mubr.f32.mxu0 0.0
      %690 = vmatmul.mubr.f32.gmra.mxu0 %v485
      %v691 = vpop.f32.mrf.mxu0
      %v692 = vadd.f32 0.0, %v691
      %v693 = vpop.f32.mrf.mxu0
      %v694 = vadd.f32 0.0, %v693
      %695 = vmatprep.mubr.f32.mxu0 0.0
      %696 = vmatmul.mubr.f32.gmra.mxu0 %v488
      %v697 = vpop.f32.mrf.mxu0
      %v698 = vadd.f32 0.0, %v697
      %v699 = vpop.f32.mrf.mxu0
      %v700 = vadd.f32 0.0, %v699
      %701 = vmatprep.mubr.f32.mxu0 0.0
      %702 = vmatmul.mubr.f32.gmra.mxu0 %v491
      %v703 = vpop.f32.mrf.mxu0
      %v704 = vadd.f32 0.0, %v703
      %v705 = vpop.f32.mrf.mxu0
      %v706 = vadd.f32 0.0, %v705
      %707 = vmatprep.mubr.f32.mxu0 0.0
      %708 = vmatmul.mubr.f32.gmra.mxu0 %v494
      %v709 = vpop.f32.mrf.mxu0
      %v710 = vadd.f32 0.0, %v709
      %v711 = vpop.f32.mrf.mxu0
      %v712 = vadd.f32 0.0, %v711
      %713 = vmatprep.mubr.f32.mxu0 0.0
      %714 = vmatmul.mubr.f32.gmra.mxu0 %v497
      %v715 = vpop.f32.mrf.mxu0
      %v716 = vadd.f32 0.0, %v715
      %v717 = vpop.f32.mrf.mxu0
      %v718 = vadd.f32 0.0, %v717
      %719 = vmatprep.mubr.f32.mxu0 0.0
      %720 = vmatmul.mubr.f32.gmra.mxu0 %v500
      %v721 = vpop.f32.mrf.mxu0
      %v722 = vadd.f32 0.0, %v721
      %v723 = vpop.f32.mrf.mxu0
      %v724 = vadd.f32 0.0, %v723
      %725 = vmatprep.mubr.f32.mxu0 0.0
      %726 = vmatmul.mubr.f32.gmra.mxu0 %v503
      %v727 = vpop.f32.mrf.mxu0
      %v728 = vadd.f32 0.0, %v727
      %v729 = vpop.f32.mrf.mxu0
      %v730 = vadd.f32 0.0, %v729
      %731 = vmatprep.mubr.f32.mxu0 0.0
      %732 = vmatmul.mubr.f32.gmra.mxu0 %v506
      %v733 = vpop.f32.mrf.mxu0
      %v734 = vadd.f32 0.0, %v733
      %v735 = vpop.f32.mrf.mxu0
      %v736 = vadd.f32 0.0, %v735
      %737 = vmatprep.mubr.f32.mxu0 0.0
      %738 = vmatmul.mubr.f32.gmra.mxu0 %v509
      %v739 = vpop.f32.mrf.mxu0
      %v740 = vadd.f32 0.0, %v739
      %v741 = vpop.f32.mrf.mxu0
      %v742 = vadd.f32 0.0, %v741
      %743 = vmatprep.mubr.f32.mxu0 0.0
      %744 = vmatmul.mubr.f32.gmra.mxu0 %v512
      %v745 = vpop.f32.mrf.mxu0
      %v746 = vadd.f32 0.0, %v745
      %v747 = vpop.f32.mrf.mxu0
      %v748 = vadd.f32 0.0, %v747
      %749 = vmatprep.mubr.f32.mxu0 0.0
      %750 = vmatmul.mubr.f32.gmra.mxu0 %v515
      %v751 = vpop.f32.mrf.mxu0
      %v752 = vadd.f32 0.0, %v751
      %v753 = vpop.f32.mrf.mxu0
      %v754 = vadd.f32 0.0, %v753
      %755 = vmatprep.mubr.f32.mxu0 0.0
      %756 = vmatmul.mubr.f32.gmra.mxu0 %v518
      %v757 = vpop.f32.mrf.mxu0
      %v758 = vadd.f32 0.0, %v757
      %v759 = vpop.f32.mrf.mxu0
      %v760 = vadd.f32 0.0, %v759
      %761 = vmatprep.mubr.f32.mxu0 0.0
      %762 = vmatmul.mubr.f32.gmra.mxu0 %v521
      %v763 = vpop.f32.mrf.mxu0
      %v764 = vadd.f32 0.0, %v763
      %v765 = vpop.f32.mrf.mxu0
      %v766 = vadd.f32 0.0, %v765
      %767 = vmatprep.mubr.f32.mxu0 0.0
      %768 = vmatmul.mubr.f32.gmra.mxu0 %v524
      %v769 = vpop.f32.mrf.mxu0
      %v770 = vadd.f32 0.0, %v769
      %v771 = vpop.f32.mrf.mxu0
      %v772 = vadd.f32 0.0, %v771
      %773 = vmatprep.mubr.f32.mxu0 0.0
      %774 = vmatmul.mubr.f32.gmra.mxu0 %v527
      %v775 = vpop.f32.mrf.mxu0
      %v776 = vadd.f32 0.0, %v775
      %v777 = vpop.f32.mrf.mxu0
      %v778 = vadd.f32 0.0, %v777
      %779 = vmatprep.mubr.f32.mxu0 0.0
      %780 = vmatmul.mubr.f32.gmra.mxu0 %v530
      %v781 = vpop.f32.mrf.mxu0
      %v782 = vadd.f32 0.0, %v781
      %v783 = vpop.f32.mrf.mxu0
      %v784 = vadd.f32 0.0, %v783
      %785 = vmatprep.mubr.f32.mxu0 0.0
      %786 = vmatmul.mubr.f32.gmra.mxu0 %v533
      %v787 = vpop.f32.mrf.mxu0
      %v788 = vadd.f32 0.0, %v787
      %v789 = vpop.f32.mrf.mxu0
      %v790 = vadd.f32 0.0, %v789
      %791 = vdwg.mxu0
      %792 = vmatprep.subr.mxu0 0.0
      %793 = vmatpush1.msra.mxu0 0.0
      %794 = vmatprep.subr.mxu0 0.0
      %795 = vmatpush1.msra.mxu0 0.0
      %796 = vmatprep.subr.mxu0 0.0
      %797 = vmatpush1.msra.mxu0 0.0
      %798 = vmatprep.subr.mxu0 0.0
      %799 = vmatpush1.msra.mxu0 0.0
      %800 = vmatprep.subr.mxu0 0.0
      %801 = vmatpush1.msra.mxu0 0.0
      %802 = vmatprep.subr.mxu0 0.0
      %803 = vmatpush1.msra.mxu0 0.0
      %804 = vmatprep.subr.mxu0 0.0
      %805 = vmatpush1.msra.mxu0 0.0
      %806 = vmatprep.subr.mxu0 0.0
      %807 = vmatpush1.msra.mxu0 0.0
      %808 = vmatprep.subr.mxu0 0.0
      %809 = vmatpush1.msra.mxu0 0.0
      %810 = vmatprep.subr.mxu0 0.0
      %811 = vmatpush1.msra.mxu0 0.0
      %812 = vmatprep.subr.mxu0 0.0
      %813 = vmatpush1.msra.mxu0 0.0
      %814 = vmatprep.subr.mxu0 0.0
      %815 = vmatpush1.msra.mxu0 0.0
      %816 = vmatprep.subr.mxu0 %v339
      %817 = vmatpush1.msra.mxu0 %v338
      %818 = vmatprep.subr.mxu0 %v335
      %819 = vmatpush1.msra.mxu0 %v334
      %820 = vmatprep.subr.mxu0 %v331
      %821 = vmatpush1.msra.mxu0 %v330
      %822 = vmatprep.subr.mxu0 %v327
      %823 = vmatpush1.msra.mxu0 %v326
      %824 = vmatprep.subr.mxu0 0.0
      %825 = vmatpush2.msra.mxu0 0.0
      %826 = vmatprep.subr.mxu0 0.0
      %827 = vmatpush2.msra.mxu0 0.0
      %828 = vmatprep.subr.mxu0 0.0
      %829 = vmatpush2.msra.mxu0 0.0
      %830 = vmatprep.subr.mxu0 0.0
      %831 = vmatpush2.msra.mxu0 0.0
      %832 = vmatprep.subr.mxu0 0.0
      %833 = vmatpush2.msra.mxu0 0.0
      %834 = vmatprep.subr.mxu0 0.0
      %835 = vmatpush2.msra.mxu0 0.0
      %836 = vmatprep.subr.mxu0 0.0
      %837 = vmatpush2.msra.mxu0 0.0
      %838 = vmatprep.subr.mxu0 0.0
      %839 = vmatpush2.msra.mxu0 0.0
      %840 = vmatprep.subr.mxu0 0.0
      %841 = vmatpush2.msra.mxu0 0.0
      %842 = vmatprep.subr.mxu0 0.0
      %843 = vmatpush2.msra.mxu0 0.0
      %844 = vmatprep.subr.mxu0 0.0
      %845 = vmatpush2.msra.mxu0 0.0
      %846 = vmatprep.subr.mxu0 0.0
      %847 = vmatpush2.msra.mxu0 0.0
      %848 = vmatprep.subr.mxu0 0.0
      %849 = vmatpush2.msra.mxu0 0.0
      %850 = vmatprep.subr.mxu0 0.0
      %851 = vmatpush2.msra.mxu0 0.0
      %852 = vmatprep.subr.mxu0 0.0
      %853 = vmatpush2.msra.mxu0 0.0
      %854 = vmatprep.subr.mxu0 0.0
      %855 = vmatpush2.msra.mxu0 0.0
      %856 = vmatprep.mubr.f32.mxu0 0.0
      %857 = vmatmul.mubr.f32.gmra.mxu0 %v440
      %v858 = vpop.f32.mrf.mxu0
      %v859 = vadd.f32 0.0, %v858
      %v860 = vpop.f32.mrf.mxu0
      %v861 = vadd.f32 0.0, %v860
      %862 = vmatprep.mubr.f32.mxu0 0.0
      %863 = vmatmul.mubr.f32.gmra.mxu0 %v443
      %v864 = vpop.f32.mrf.mxu0
      %v865 = vadd.f32 0.0, %v864
      %v866 = vpop.f32.mrf.mxu0
      %v867 = vadd.f32 0.0, %v866
      %868 = vmatprep.mubr.f32.mxu0 0.0
      %869 = vmatmul.mubr.f32.gmra.mxu0 %v446
      %v870 = vpop.f32.mrf.mxu0
      %v871 = vadd.f32 0.0, %v870
      %v872 = vpop.f32.mrf.mxu0
      %v873 = vadd.f32 0.0, %v872
      %874 = vmatprep.mubr.f32.mxu0 0.0
      %875 = vmatmul.mubr.f32.gmra.mxu0 %v449
      %v876 = vpop.f32.mrf.mxu0
      %v877 = vadd.f32 0.0, %v876
      %v878 = vpop.f32.mrf.mxu0
      %v879 = vadd.f32 0.0, %v878
      %880 = vmatprep.mubr.f32.mxu0 0.0
      %881 = vmatmul.mubr.f32.gmra.mxu0 %v452
      %v882 = vpop.f32.mrf.mxu0
      %v883 = vadd.f32 0.0, %v882
      %v884 = vpop.f32.mrf.mxu0
      %v885 = vadd.f32 0.0, %v884
      %886 = vmatprep.mubr.f32.mxu0 0.0
      %887 = vmatmul.mubr.f32.gmra.mxu0 %v455
      %v888 = vpop.f32.mrf.mxu0
      %v889 = vadd.f32 0.0, %v888
      %v890 = vpop.f32.mrf.mxu0
      %v891 = vadd.f32 0.0, %v890
      %892 = vmatprep.mubr.f32.mxu0 0.0
      %893 = vmatmul.mubr.f32.gmra.mxu0 %v458
      %v894 = vpop.f32.mrf.mxu0
      %v895 = vadd.f32 0.0, %v894
      %v896 = vpop.f32.mrf.mxu0
      %v897 = vadd.f32 0.0, %v896
      %898 = vmatprep.mubr.f32.mxu0 0.0
      %899 = vmatmul.mubr.f32.gmra.mxu0 %v461
      %v900 = vpop.f32.mrf.mxu0
      %v901 = vadd.f32 0.0, %v900
      %v902 = vpop.f32.mrf.mxu0
      %v903 = vadd.f32 0.0, %v902
      %904 = vmatprep.mubr.f32.mxu0 0.0
      %905 = vmatmul.mubr.f32.gmra.mxu0 %v464
      %v906 = vpop.f32.mrf.mxu0
      %v907 = vadd.f32 0.0, %v906
      %v908 = vpop.f32.mrf.mxu0
      %v909 = vadd.f32 0.0, %v908
      %910 = vmatprep.mubr.f32.mxu0 0.0
      %911 = vmatmul.mubr.f32.gmra.mxu0 %v467
      %v912 = vpop.f32.mrf.mxu0
      %v913 = vadd.f32 0.0, %v912
      %v914 = vpop.f32.mrf.mxu0
      %v915 = vadd.f32 0.0, %v914
      %916 = vmatprep.mubr.f32.mxu0 0.0
      %917 = vmatmul.mubr.f32.gmra.mxu0 %v470
      %v918 = vpop.f32.mrf.mxu0
      %v919 = vadd.f32 0.0, %v918
      %v920 = vpop.f32.mrf.mxu0
      %v921 = vadd.f32 0.0, %v920
      %922 = vmatprep.mubr.f32.mxu0 0.0
      %923 = vmatmul.mubr.f32.gmra.mxu0 %v473
      %v924 = vpop.f32.mrf.mxu0
      %v925 = vadd.f32 0.0, %v924
      %v926 = vpop.f32.mrf.mxu0
      %v927 = vadd.f32 0.0, %v926
      %928 = vmatprep.mubr.f32.mxu0 0.0
      %929 = vmatmul.mubr.f32.gmra.mxu0 %v476
      %v930 = vpop.f32.mrf.mxu0
      %v931 = vadd.f32 0.0, %v930
      %v932 = vpop.f32.mrf.mxu0
      %v933 = vadd.f32 0.0, %v932
      %934 = vmatprep.mubr.f32.mxu0 0.0
      %935 = vmatmul.mubr.f32.gmra.mxu0 %v479
      %v936 = vpop.f32.mrf.mxu0
      %v937 = vadd.f32 0.0, %v936
      %v938 = vpop.f32.mrf.mxu0
      %v939 = vadd.f32 0.0, %v938
      %940 = vmatprep.mubr.f32.mxu0 0.0
      %941 = vmatmul.mubr.f32.gmra.mxu0 %v482
      %v942 = vpop.f32.mrf.mxu0
      %v943 = vadd.f32 0.0, %v942
      %v944 = vpop.f32.mrf.mxu0
      %v945 = vadd.f32 0.0, %v944
      %946 = vmatprep.mubr.f32.mxu0 0.0
      %947 = vmatmul.mubr.f32.gmra.mxu0 %v485
      %v948 = vpop.f32.mrf.mxu0
      %v949 = vadd.f32 0.0, %v948
      %v950 = vpop.f32.mrf.mxu0
      %v951 = vadd.f32 0.0, %v950
      %952 = vmatprep.mubr.f32.mxu0 0.0
      %953 = vmatmul.mubr.f32.gmra.mxu0 %v488
      %v954 = vpop.f32.mrf.mxu0
      %v955 = vadd.f32 0.0, %v954
      %v956 = vpop.f32.mrf.mxu0
      %v957 = vadd.f32 0.0, %v956
      %958 = vmatprep.mubr.f32.mxu0 0.0
      %959 = vmatmul.mubr.f32.gmra.mxu0 %v491
      %v960 = vpop.f32.mrf.mxu0
      %v961 = vadd.f32 0.0, %v960
      %v962 = vpop.f32.mrf.mxu0
      %v963 = vadd.f32 0.0, %v962
      %964 = vmatprep.mubr.f32.mxu0 0.0
      %965 = vmatmul.mubr.f32.gmra.mxu0 %v494
      %v966 = vpop.f32.mrf.mxu0
      %v967 = vadd.f32 0.0, %v966
      %v968 = vpop.f32.mrf.mxu0
      %v969 = vadd.f32 0.0, %v968
      %970 = vmatprep.mubr.f32.mxu0 0.0
      %971 = vmatmul.mubr.f32.gmra.mxu0 %v497
      %v972 = vpop.f32.mrf.mxu0
      %v973 = vadd.f32 0.0, %v972
      %v974 = vpop.f32.mrf.mxu0
      %v975 = vadd.f32 0.0, %v974
      %976 = vmatprep.mubr.f32.mxu0 0.0
      %977 = vmatmul.mubr.f32.gmra.mxu0 %v500
      %v978 = vpop.f32.mrf.mxu0
      %v979 = vadd.f32 0.0, %v978
      %v980 = vpop.f32.mrf.mxu0
      %v981 = vadd.f32 0.0, %v980
      %982 = vmatprep.mubr.f32.mxu0 0.0
      %983 = vmatmul.mubr.f32.gmra.mxu0 %v503
      %v984 = vpop.f32.mrf.mxu0
      %v985 = vadd.f32 0.0, %v984
      %v986 = vpop.f32.mrf.mxu0
      %v987 = vadd.f32 0.0, %v986
      %988 = vmatprep.mubr.f32.mxu0 0.0
      %989 = vmatmul.mubr.f32.gmra.mxu0 %v506
      %v990 = vpop.f32.mrf.mxu0
      %v991 = vadd.f32 0.0, %v990
      %v992 = vpop.f32.mrf.mxu0
      %v993 = vadd.f32 0.0, %v992
      %994 = vmatprep.mubr.f32.mxu0 0.0
      %995 = vmatmul.mubr.f32.gmra.mxu0 %v509
      %v996 = vpop.f32.mrf.mxu0
      %v997 = vadd.f32 0.0, %v996
      %v998 = vpop.f32.mrf.mxu0
      %v999 = vadd.f32 0.0, %v998
      %1000 = vmatprep.mubr.f32.mxu0 0.0
      %1001 = vmatmul.mubr.f32.gmra.mxu0 %v512
      %v1002 = vpop.f32.mrf.mxu0
      %v1003 = vadd.f32 0.0, %v1002
      %v1004 = vpop.f32.mrf.mxu0
      %v1005 = vadd.f32 0.0, %v1004
      %1006 = vmatprep.mubr.f32.mxu0 0.0
      %1007 = vmatmul.mubr.f32.gmra.mxu0 %v515
      %v1008 = vpop.f32.mrf.mxu0
      %v1009 = vadd.f32 0.0, %v1008
      %v1010 = vpop.f32.mrf.mxu0
      %v1011 = vadd.f32 0.0, %v1010
      %1012 = vmatprep.mubr.f32.mxu0 0.0
      %1013 = vmatmul.mubr.f32.gmra.mxu0 %v518
      %v1014 = vpop.f32.mrf.mxu0
      %v1015 = vadd.f32 0.0, %v1014
      %v1016 = vpop.f32.mrf.mxu0
      %v1017 = vadd.f32 0.0, %v1016
      %1018 = vmatprep.mubr.f32.mxu0 0.0
      %1019 = vmatmul.mubr.f32.gmra.mxu0 %v521
      %v1020 = vpop.f32.mrf.mxu0
      %v1021 = vadd.f32 0.0, %v1020
      %v1022 = vpop.f32.mrf.mxu0
      %v1023 = vadd.f32 0.0, %v1022
      %1024 = vmatprep.mubr.f32.mxu0 0.0
      %1025 = vmatmul.mubr.f32.gmra.mxu0 %v524
      %v1026 = vpop.f32.mrf.mxu0
      %v1027 = vadd.f32 0.0, %v1026
      %v1028 = vpop.f32.mrf.mxu0
      %v1029 = vadd.f32 0.0, %v1028
      %1030 = vmatprep.mubr.f32.mxu0 0.0
      %1031 = vmatmul.mubr.f32.gmra.mxu0 %v527
      %v1032 = vpop.f32.mrf.mxu0
      %v1033 = vadd.f32 0.0, %v1032
      %v1034 = vpop.f32.mrf.mxu0
      %v1035 = vadd.f32 0.0, %v1034
      %1036 = vmatprep.mubr.f32.mxu0 0.0
      %1037 = vmatmul.mubr.f32.gmra.mxu0 %v530
      %v1038 = vpop.f32.mrf.mxu0
      %v1039 = vadd.f32 0.0, %v1038
      %v1040 = vpop.f32.mrf.mxu0
      %v1041 = vadd.f32 0.0, %v1040
      %1042 = vmatprep.mubr.f32.mxu0 0.0
      %1043 = vmatmul.mubr.f32.gmra.mxu0 %v533
      %v1044 = vpop.f32.mrf.mxu0
      %v1045 = vadd.f32 0.0, %v1044
      %v1046 = vpop.f32.mrf.mxu0
      %v1047 = vadd.f32 0.0, %v1046
      %1048 = vdwg.mxu0
      %v1049 = vsub.f32 %v602, 14.285714
      %v1050 = vsub.f32 %v604, 14.285714
      %v1051 = vsub.f32 %v859, 14.285714
      %v1052 = vsub.f32 %v861, 14.285714
      %v1053 = vsub.f32 %v608, 14.285714
      %v1054 = vsub.f32 %v610, 14.285714
      %v1055 = vsub.f32 %v865, 14.285714
      %v1056 = vsub.f32 %v867, 14.285714
      %v1057 = vsub.f32 %v614, 14.285714
      %v1058 = vsub.f32 %v616, 14.285714
      %v1059 = vsub.f32 %v871, 14.285714
      %v1060 = vsub.f32 %v873, 14.285714
      %v1061 = vsub.f32 %v620, 14.285714
      %v1062 = vsub.f32 %v622, 14.285714
      %v1063 = vsub.f32 %v877, 14.285714
      %v1064 = vsub.f32 %v879, 14.285714
      %v1065 = vsub.f32 %v626, 14.285714
      %v1066 = vsub.f32 %v628, 14.285714
      %v1067 = vsub.f32 %v883, 14.285714
      %v1068 = vsub.f32 %v885, 14.285714
      %v1069 = vsub.f32 %v632, 14.285714
      %v1070 = vsub.f32 %v634, 14.285714
      %v1071 = vsub.f32 %v889, 14.285714
      %v1072 = vsub.f32 %v891, 14.285714
      %v1073 = vsub.f32 %v638, 14.285714
      %v1074 = vsub.f32 %v640, 14.285714
      %v1075 = vsub.f32 %v895, 14.285714
      %v1076 = vsub.f32 %v897, 14.285714
      %v1077 = vsub.f32 %v644, 14.285714
      %v1078 = vsub.f32 %v646, 14.285714
      %v1079 = vsub.f32 %v901, 14.285714
      %v1080 = vsub.f32 %v903, 14.285714
      %v1081 = vsub.f32 %v650, 14.285714
      %v1082 = vsub.f32 %v652, 14.285714
      %v1083 = vsub.f32 %v907, 14.285714
      %v1084 = vsub.f32 %v909, 14.285714
      %v1085 = vsub.f32 %v656, 14.285714
      %v1086 = vsub.f32 %v658, 14.285714
      %v1087 = vsub.f32 %v913, 14.285714
      %v1088 = vsub.f32 %v915, 14.285714
      %v1089 = vsub.f32 %v662, 14.285714
      %v1090 = vsub.f32 %v664, 14.285714
      %v1091 = vsub.f32 %v919, 14.285714
      %v1092 = vsub.f32 %v921, 14.285714
      %v1093 = vsub.f32 %v668, 14.285714
      %v1094 = vsub.f32 %v670, 14.285714
      %v1095 = vsub.f32 %v925, 14.285714
      %v1096 = vsub.f32 %v927, 14.285714
      %v1097 = vsub.f32 %v674, 14.285714
      %v1098 = vsub.f32 %v676, 14.285714
      %v1099 = vsub.f32 %v931, 14.285714
      %v1100 = vsub.f32 %v933, 14.285714
      %v1101 = vsub.f32 %v680, 14.285714
      %v1102 = vsub.f32 %v682, 14.285714
      %v1103 = vsub.f32 %v937, 14.285714
      %v1104 = vsub.f32 %v939, 14.285714
      %v1105 = vsub.f32 %v686, 14.285714
      %v1106 = vsub.f32 %v688, 14.285714
      %v1107 = vsub.f32 %v943, 14.285714
      %v1108 = vsub.f32 %v945, 14.285714
      %v1109 = vsub.f32 %v692, 14.285714
      %v1110 = vsub.f32 %v694, 14.285714
      %v1111 = vsub.f32 %v949, 14.285714
      %v1112 = vsub.f32 %v951, 14.285714
      %v1113 = vsub.f32 %v698, 14.285714
      %v1114 = vsub.f32 %v700, 14.285714
      %v1115 = vsub.f32 %v955, 14.285714
      %v1116 = vsub.f32 %v957, 14.285714
      %v1117 = vsub.f32 %v704, 14.285714
      %v1118 = vsub.f32 %v706, 14.285714
      %v1119 = vsub.f32 %v961, 14.285714
      %v1120 = vsub.f32 %v963, 14.285714
      %v1121 = vsub.f32 %v710, 14.285714
      %v1122 = vsub.f32 %v712, 14.285714
      %v1123 = vsub.f32 %v967, 14.285714
      %v1124 = vsub.f32 %v969, 14.285714
      %v1125 = vsub.f32 %v716, 14.285714
      %v1126 = vsub.f32 %v718, 14.285714
      %v1127 = vsub.f32 %v973, 14.285714
      %v1128 = vsub.f32 %v975, 14.285714
      %v1129 = vsub.f32 %v722, 14.285714
      %v1130 = vsub.f32 %v724, 14.285714
      %v1131 = vsub.f32 %v979, 14.285714
      %v1132 = vsub.f32 %v981, 14.285714
      %v1133 = vsub.f32 %v728, 14.285714
      %v1134 = vsub.f32 %v730, 14.285714
      %v1135 = vsub.f32 %v985, 14.285714
      %v1136 = vsub.f32 %v987, 14.285714
      %v1137 = vsub.f32 %v734, 14.285714
      %v1138 = vsub.f32 %v736, 14.285714
      %v1139 = vsub.f32 %v991, 14.285714
      %v1140 = vsub.f32 %v993, 14.285714
      %v1141 = vsub.f32 %v740, 14.285714
      %v1142 = vsub.f32 %v742, 14.285714
      %v1143 = vsub.f32 %v997, 14.285714
      %v1144 = vsub.f32 %v999, 14.285714
      %v1145 = vsub.f32 %v746, 14.285714
      %v1146 = vsub.f32 %v748, 14.285714
      %v1147 = vsub.f32 %v1003, 14.285714
      %v1148 = vsub.f32 %v1005, 14.285714
      %v1149 = vsub.f32 %v752, 14.285714
      %v1150 = vsub.f32 %v754, 14.285714
      %v1151 = vsub.f32 %v1009, 14.285714
      %v1152 = vsub.f32 %v1011, 14.285714
      %v1153 = vsub.f32 %v758, 14.285714
      %v1154 = vsub.f32 %v760, 14.285714
      %v1155 = vsub.f32 %v1015, 14.285714
      %v1156 = vsub.f32 %v1017, 14.285714
      %v1157 = vsub.f32 %v764, 14.285714
      %v1158 = vsub.f32 %v766, 14.285714
      %v1159 = vsub.f32 %v1021, 14.285714
      %v1160 = vsub.f32 %v1023, 14.285714
      %v1161 = vsub.f32 %v770, 14.285714
      %v1162 = vsub.f32 %v772, 14.285714
      %v1163 = vsub.f32 %v1027, 14.285714
      %v1164 = vsub.f32 %v1029, 14.285714
      %v1165 = vsub.f32 %v776, 14.285714
      %v1166 = vsub.f32 %v778, 14.285714
      %v1167 = vsub.f32 %v1033, 14.285714
      %v1168 = vsub.f32 %v1035, 14.285714
      %v1169 = vsub.f32 %v782, 14.285714
      %v1170 = vsub.f32 %v784, 14.285714
      %v1171 = vsub.f32 %v1039, 14.285714
      %v1172 = vsub.f32 %v1041, 14.285714
      %v1173 = vsub.f32 %v788, 14.285714
      %v1174 = vsub.f32 %v790, 14.285714
      %v1175 = vsub.f32 %v1045, 14.285714
      %v1176 = vsub.f32 %v1047, 14.285714
      %v1177 = vmul.f32 %v1049, 1.442695
      %v1178 = vpow.pop %v1177
      %v1179 = vmul.f32 %v1050, 1.442695
      %v1180 = vpow.pop %v1179
      %v1181 = vmul.f32 %v1051, 1.442695
      %v1182 = vpow.pop %v1181
      %v1183 = vmul.f32 %v1052, 1.442695
      %v1184 = vpow.pop %v1183
      %v1185 = vmul.f32 %v1053, 1.442695
      %v1186 = vpow.pop %v1185
      %v1187 = vmul.f32 %v1054, 1.442695
      %v1188 = vpow.pop %v1187
      %v1189 = vmul.f32 %v1055, 1.442695
      %v1190 = vpow.pop %v1189
      %v1191 = vmul.f32 %v1056, 1.442695
      %v1192 = vpow.pop %v1191
      %v1193 = vmul.f32 %v1057, 1.442695
      %v1194 = vpow.pop %v1193
      %v1195 = vmul.f32 %v1058, 1.442695
      %v1196 = vpow.pop %v1195
      %v1197 = vmul.f32 %v1059, 1.442695
      %v1198 = vpow.pop %v1197
      %v1199 = vmul.f32 %v1060, 1.442695
      %v1200 = vpow.pop %v1199
      %v1201 = vmul.f32 %v1061, 1.442695
      %v1202 = vpow.pop %v1201
      %v1203 = vmul.f32 %v1062, 1.442695
      %v1204 = vpow.pop %v1203
      %v1205 = vmul.f32 %v1063, 1.442695
      %v1206 = vpow.pop %v1205
      %v1207 = vmul.f32 %v1064, 1.442695
      %v1208 = vpow.pop %v1207
      %v1209 = vmul.f32 %v1065, 1.442695
      %v1210 = vpow.pop %v1209
      %v1211 = vmul.f32 %v1066, 1.442695
      %v1212 = vpow.pop %v1211
      %v1213 = vmul.f32 %v1067, 1.442695
      %v1214 = vpow.pop %v1213
      %v1215 = vmul.f32 %v1068, 1.442695
      %v1216 = vpow.pop %v1215
      %v1217 = vmul.f32 %v1069, 1.442695
      %v1218 = vpow.pop %v1217
      %v1219 = vmul.f32 %v1070, 1.442695
      %v1220 = vpow.pop %v1219
      %v1221 = vmul.f32 %v1071, 1.442695
      %v1222 = vpow.pop %v1221
      %v1223 = vmul.f32 %v1072, 1.442695
      %v1224 = vpow.pop %v1223
      %v1225 = vmul.f32 %v1073, 1.442695
      %v1226 = vpow.pop %v1225
      %v1227 = vmul.f32 %v1074, 1.442695
      %v1228 = vpow.pop %v1227
      %v1229 = vmul.f32 %v1075, 1.442695
      %v1230 = vpow.pop %v1229
      %v1231 = vmul.f32 %v1076, 1.442695
      %v1232 = vpow.pop %v1231
      %v1233 = vmul.f32 %v1077, 1.442695
      %v1234 = vpow.pop %v1233
      %v1235 = vmul.f32 %v1078, 1.442695
      %v1236 = vpow.pop %v1235
      %v1237 = vmul.f32 %v1079, 1.442695
      %v1238 = vpow.pop %v1237
      %v1239 = vmul.f32 %v1080, 1.442695
      %v1240 = vpow.pop %v1239
      %v1241 = vmul.f32 %v1081, 1.442695
      %v1242 = vpow.pop %v1241
      %v1243 = vmul.f32 %v1082, 1.442695
      %v1244 = vpow.pop %v1243
      %v1245 = vmul.f32 %v1083, 1.442695
      %v1246 = vpow.pop %v1245
      %v1247 = vmul.f32 %v1084, 1.442695
      %v1248 = vpow.pop %v1247
      %v1249 = vmul.f32 %v1085, 1.442695
      %v1250 = vpow.pop %v1249
      %v1251 = vmul.f32 %v1086, 1.442695
      %v1252 = vpow.pop %v1251
      %v1253 = vmul.f32 %v1087, 1.442695
      %v1254 = vpow.pop %v1253
      %v1255 = vmul.f32 %v1088, 1.442695
      %v1256 = vpow.pop %v1255
      %v1257 = vmul.f32 %v1089, 1.442695
      %v1258 = vpow.pop %v1257
      %v1259 = vmul.f32 %v1090, 1.442695
      %v1260 = vpow.pop %v1259
      %v1261 = vmul.f32 %v1091, 1.442695
      %v1262 = vpow.pop %v1261
      %v1263 = vmul.f32 %v1092, 1.442695
      %v1264 = vpow.pop %v1263
      %v1265 = vmul.f32 %v1093, 1.442695
      %v1266 = vpow.pop %v1265
      %v1267 = vmul.f32 %v1094, 1.442695
      %v1268 = vpow.pop %v1267
      %v1269 = vmul.f32 %v1095, 1.442695
      %v1270 = vpow.pop %v1269
      %v1271 = vmul.f32 %v1096, 1.442695
      %v1272 = vpow.pop %v1271
      %v1273 = vmul.f32 %v1097, 1.442695
      %v1274 = vpow.pop %v1273
      %v1275 = vmul.f32 %v1098, 1.442695
      %v1276 = vpow.pop %v1275
      %v1277 = vmul.f32 %v1099, 1.442695
      %v1278 = vpow.pop %v1277
      %v1279 = vmul.f32 %v1100, 1.442695
      %v1280 = vpow.pop %v1279
      %v1281 = vmul.f32 %v1101, 1.442695
      %v1282 = vpow.pop %v1281
      %v1283 = vmul.f32 %v1102, 1.442695
      %v1284 = vpow.pop %v1283
      %v1285 = vmul.f32 %v1103, 1.442695
      %v1286 = vpow.pop %v1285
      %v1287 = vmul.f32 %v1104, 1.442695
      %v1288 = vpow.pop %v1287
      %v1289 = vmul.f32 %v1105, 1.442695
      %v1290 = vpow.pop %v1289
      %v1291 = vmul.f32 %v1106, 1.442695
      %v1292 = vpow.pop %v1291
      %v1293 = vmul.f32 %v1107, 1.442695
      %v1294 = vpow.pop %v1293
      %v1295 = vmul.f32 %v1108, 1.442695
      %v1296 = vpow.pop %v1295
      %v1297 = vmul.f32 %v1109, 1.442695
      %v1298 = vpow.pop %v1297
      %v1299 = vmul.f32 %v1110, 1.442695
      %v1300 = vpow.pop %v1299
      %v1301 = vmul.f32 %v1111, 1.442695
      %v1302 = vpow.pop %v1301
      %v1303 = vmul.f32 %v1112, 1.442695
      %v1304 = vpow.pop %v1303
      %v1305 = vmul.f32 %v1113, 1.442695
      %v1306 = vpow.pop %v1305
      %v1307 = vmul.f32 %v1114, 1.442695
      %v1308 = vpow.pop %v1307
      %v1309 = vmul.f32 %v1115, 1.442695
      %v1310 = vpow.pop %v1309
      %v1311 = vmul.f32 %v1116, 1.442695
      %v1312 = vpow.pop %v1311
      %v1313 = vmul.f32 %v1117, 1.442695
      %v1314 = vpow.pop %v1313
      %v1315 = vmul.f32 %v1118, 1.442695
      %v1316 = vpow.pop %v1315
      %v1317 = vmul.f32 %v1119, 1.442695
      %v1318 = vpow.pop %v1317
      %v1319 = vmul.f32 %v1120, 1.442695
      %v1320 = vpow.pop %v1319
      %v1321 = vmul.f32 %v1121, 1.442695
      %v1322 = vpow.pop %v1321
      %v1323 = vmul.f32 %v1122, 1.442695
      %v1324 = vpow.pop %v1323
      %v1325 = vmul.f32 %v1123, 1.442695
      %v1326 = vpow.pop %v1325
      %v1327 = vmul.f32 %v1124, 1.442695
      %v1328 = vpow.pop %v1327
      %v1329 = vmul.f32 %v1125, 1.442695
      %v1330 = vpow.pop %v1329
      %v1331 = vmul.f32 %v1126, 1.442695
      %v1332 = vpow.pop %v1331
      %v1333 = vmul.f32 %v1127, 1.442695
      %v1334 = vpow.pop %v1333
      %v1335 = vmul.f32 %v1128, 1.442695
      %v1336 = vpow.pop %v1335
      %v1337 = vmul.f32 %v1129, 1.442695
      %v1338 = vpow.pop %v1337
      %v1339 = vmul.f32 %v1130, 1.442695
      %v1340 = vpow.pop %v1339
      %v1341 = vmul.f32 %v1131, 1.442695
      %v1342 = vpow.pop %v1341
      %v1343 = vmul.f32 %v1132, 1.442695
      %v1344 = vpow.pop %v1343
      %v1345 = vmul.f32 %v1133, 1.442695
      %v1346 = vpow.pop %v1345
      %v1347 = vmul.f32 %v1134, 1.442695
      %v1348 = vpow.pop %v1347
      %v1349 = vmul.f32 %v1135, 1.442695
      %v1350 = vpow.pop %v1349
      %v1351 = vmul.f32 %v1136, 1.442695
      %v1352 = vpow.pop %v1351
      %v1353 = vmul.f32 %v1137, 1.442695
      %v1354 = vpow.pop %v1353
      %v1355 = vmul.f32 %v1138, 1.442695
      %v1356 = vpow.pop %v1355
      %v1357 = vmul.f32 %v1139, 1.442695
      %v1358 = vpow.pop %v1357
      %v1359 = vmul.f32 %v1140, 1.442695
      %v1360 = vpow.pop %v1359
      %v1361 = vmul.f32 %v1141, 1.442695
      %v1362 = vpow.pop %v1361
      %v1363 = vmul.f32 %v1142, 1.442695
      %v1364 = vpow.pop %v1363
      %v1365 = vmul.f32 %v1143, 1.442695
      %v1366 = vpow.pop %v1365
      %v1367 = vmul.f32 %v1144, 1.442695
      %v1368 = vpow.pop %v1367
      %v1369 = vmul.f32 %v1145, 1.442695
      %v1370 = vpow.pop %v1369
      %v1371 = vmul.f32 %v1146, 1.442695
      %v1372 = vpow.pop %v1371
      %v1373 = vmul.f32 %v1147, 1.442695
      %v1374 = vpow.pop %v1373
      %v1375 = vmul.f32 %v1148, 1.442695
      %v1376 = vpow.pop %v1375
      %v1377 = vmul.f32 %v1149, 1.442695
      %v1378 = vpow.pop %v1377
      %v1379 = vmul.f32 %v1150, 1.442695
      %v1380 = vpow.pop %v1379
      %v1381 = vmul.f32 %v1151, 1.442695
      %v1382 = vpow.pop %v1381
      %v1383 = vmul.f32 %v1152, 1.442695
      %v1384 = vpow.pop %v1383
      %v1385 = vmul.f32 %v1153, 1.442695
      %v1386 = vpow.pop %v1385
      %v1387 = vmul.f32 %v1154, 1.442695
      %v1388 = vpow.pop %v1387
      %v1389 = vmul.f32 %v1155, 1.442695
      %v1390 = vpow.pop %v1389
      %v1391 = vmul.f32 %v1156, 1.442695
      %v1392 = vpow.pop %v1391
      %v1393 = vmul.f32 %v1157, 1.442695
      %v1394 = vpow.pop %v1393
      %v1395 = vmul.f32 %v1158, 1.442695
      %v1396 = vpow.pop %v1395
      %v1397 = vmul.f32 %v1159, 1.442695
      %v1398 = vpow.pop %v1397
      %v1399 = vmul.f32 %v1160, 1.442695
      %v1400 = vpow.pop %v1399
      %v1401 = vmul.f32 %v1161, 1.442695
      %v1402 = vpow.pop %v1401
      %v1403 = vmul.f32 %v1162, 1.442695
      %v1404 = vpow.pop %v1403
      %v1405 = vmul.f32 %v1163, 1.442695
      %v1406 = vpow.pop %v1405
      %v1407 = vmul.f32 %v1164, 1.442695
      %v1408 = vpow.pop %v1407
      %v1409 = vmul.f32 %v1165, 1.442695
      %v1410 = vpow.pop %v1409
      %v1411 = vmul.f32 %v1166, 1.442695
      %v1412 = vpow.pop %v1411
      %v1413 = vmul.f32 %v1167, 1.442695
      %v1414 = vpow.pop %v1413
      %v1415 = vmul.f32 %v1168, 1.442695
      %v1416 = vpow.pop %v1415
      %v1417 = vmul.f32 %v1169, 1.442695
      %v1418 = vpow.pop %v1417
      %v1419 = vmul.f32 %v1170, 1.442695
      %v1420 = vpow.pop %v1419
      %v1421 = vmul.f32 %v1171, 1.442695
      %v1422 = vpow.pop %v1421
      %v1423 = vmul.f32 %v1172, 1.442695
      %v1424 = vpow.pop %v1423
      %v1425 = vmul.f32 %v1173, 1.442695
      %v1426 = vpow.pop %v1425
      %v1427 = vmul.f32 %v1174, 1.442695
      %v1428 = vpow.pop %v1427
      %v1429 = vmul.f32 %v1175, 1.442695
      %v1430 = vpow.pop %v1429
      %v1431 = vmul.f32 %v1176, 1.442695
      %v1432 = vpow.pop %v1431
      %v1433 = vld [vmem:[#allocation2] sm:$0xff]
      %v1434 = vld [vmem:[#allocation2 + $0x8] sm:$0xff]
      %v1435 = vld [vmem:[#allocation2 + $0x10] sm:$0xff]
      %v1436 = vld [vmem:[#allocation2 + $0x18] sm:$0xff]
      %v1437 = vld [vmem:[#allocation2 + $0x20] sm:$0xff]
      %v1438 = vld [vmem:[#allocation2 + $0x28] sm:$0xff]
      %v1439 = vld [vmem:[#allocation2 + $0x30] sm:$0xff]
      %v1440 = vld [vmem:[#allocation2 + $0x38] sm:$0xff]
      %v1441 = vld [vmem:[#allocation2 + $0x40] sm:$0xff]
      %v1442 = vld [vmem:[#allocation2 + $0x48] sm:$0xff]
      %v1443 = vld [vmem:[#allocation2 + $0x50] sm:$0xff]
      %v1444 = vld [vmem:[#allocation2 + $0x58] sm:$0xff]
      %v1445 = vld [vmem:[#allocation2 + $0x60] sm:$0xff]
      %v1446 = vld [vmem:[#allocation2 + $0x68] sm:$0xff]
      %v1447 = vld [vmem:[#allocation2 + $0x70] sm:$0xff]
      %v1448 = vld [vmem:[#allocation2 + $0x78] sm:$0xff]
      %v1449 = vld [vmem:[#allocation2 + $0x80] sm:$0xff]
      %v1450 = vld [vmem:[#allocation2 + $0x88] sm:$0xff]
      %v1451 = vld [vmem:[#allocation2 + $0x90] sm:$0xff]
      %v1452 = vld [vmem:[#allocation2 + $0x98] sm:$0xff]
      %v1453 = vld [vmem:[#allocation2 + $0xa0] sm:$0xff]
      %v1454 = vld [vmem:[#allocation2 + $0xa8] sm:$0xff]
      %v1455 = vld [vmem:[#allocation2 + $0xb0] sm:$0xff]
      %v1456 = vld [vmem:[#allocation2 + $0xb8] sm:$0xff]
      %v1457 = vld [vmem:[#allocation2 + $0xc0] sm:$0xff]
      %v1458 = vld [vmem:[#allocation2 + $0xc8] sm:$0xff]
      %v1459 = vld [vmem:[#allocation2 + $0xd0] sm:$0xff]
      %v1460 = vld [vmem:[#allocation2 + $0xd8] sm:$0xff]
      %v1461 = vld [vmem:[#allocation2 + $0xe0] sm:$0xff]
      %v1462 = vld [vmem:[#allocation2 + $0xe8] sm:$0xff]
      %v1463 = vld [vmem:[#allocation2 + $0xf0] sm:$0xff]
      %v1464 = vld [vmem:[#allocation2 + $0xf8] sm:$0xff]
      %1465 = vmatprep.subr.mxu0 0.0
      %1466 = vmatpush1.msra.mxu0 %v357
      %1467 = vmatprep.subr.mxu0 0.0
      %1468 = vmatpush1.msra.mxu0 %v356
      %1469 = vmatprep.subr.mxu0 0.0
      %1470 = vmatpush1.msra.mxu0 %v355
      %1471 = vmatprep.subr.mxu0 0.0
      %1472 = vmatpush1.msra.mxu0 %v354
      %1473 = vmatprep.subr.mxu0 0.0
      %1474 = vmatpush1.msra.mxu0 %v353
      %1475 = vmatprep.subr.mxu0 0.0
      %1476 = vmatpush1.msra.mxu0 %v352
      %1477 = vmatprep.subr.mxu0 0.0
      %1478 = vmatpush1.msra.mxu0 %v351
      %1479 = vmatprep.subr.mxu0 0.0
      %1480 = vmatpush1.msra.mxu0 %v350
      %1481 = vmatprep.subr.mxu0 0.0
      %1482 = vmatpush1.msra.mxu0 %v349
      %1483 = vmatprep.subr.mxu0 0.0
      %1484 = vmatpush1.msra.mxu0 %v348
      %1485 = vmatprep.subr.mxu0 0.0
      %1486 = vmatpush1.msra.mxu0 %v347
      %1487 = vmatprep.subr.mxu0 0.0
      %1488 = vmatpush1.msra.mxu0 %v346
      %1489 = vmatprep.subr.mxu0 0.0
      %1490 = vmatpush1.msra.mxu0 %v345
      %1491 = vmatprep.subr.mxu0 0.0
      %1492 = vmatpush1.msra.mxu0 %v344
      %1493 = vmatprep.subr.mxu0 0.0
      %1494 = vmatpush1.msra.mxu0 %v343
      %1495 = vmatprep.subr.mxu0 0.0
      %1496 = vmatpush1.msra.mxu0 %v342
      %1497 = vmatprep.subr.mxu0 0.0
      %1498 = vmatpush2.msra.mxu0 %v373
      %1499 = vmatprep.subr.mxu0 0.0
      %1500 = vmatpush2.msra.mxu0 %v372
      %1501 = vmatprep.subr.mxu0 0.0
      %1502 = vmatpush2.msra.mxu0 %v371
      %1503 = vmatprep.subr.mxu0 0.0
      %1504 = vmatpush2.msra.mxu0 %v370
      %1505 = vmatprep.subr.mxu0 0.0
      %1506 = vmatpush2.msra.mxu0 %v369
      %1507 = vmatprep.subr.mxu0 0.0
      %1508 = vmatpush2.msra.mxu0 %v368
      %1509 = vmatprep.subr.mxu0 0.0
      %1510 = vmatpush2.msra.mxu0 %v367
      %1511 = vmatprep.subr.mxu0 0.0
      %1512 = vmatpush2.msra.mxu0 %v366
      %1513 = vmatprep.subr.mxu0 0.0
      %1514 = vmatpush2.msra.mxu0 %v365
      %1515 = vmatprep.subr.mxu0 0.0
      %1516 = vmatpush2.msra.mxu0 %v364
      %1517 = vmatprep.subr.mxu0 0.0
      %1518 = vmatpush2.msra.mxu0 %v363
      %1519 = vmatprep.subr.mxu0 0.0
      %1520 = vmatpush2.msra.mxu0 %v362
      %1521 = vmatprep.subr.mxu0 0.0
      %1522 = vmatpush2.msra.mxu0 %v361
      %1523 = vmatprep.subr.mxu0 0.0
      %1524 = vmatpush2.msra.mxu0 %v360
      %1525 = vmatprep.subr.mxu0 0.0
      %1526 = vmatpush2.msra.mxu0 %v359
      %1527 = vmatprep.subr.mxu0 0.0
      %1528 = vmatpush2.msra.mxu0 %v358
      %1529 = vmatprep.mubr.f32.mxu0 %v1180
      %1530 = vmatmul.mubr.f32.gmra.mxu0 %v1178
      %v1531 = vpop.f32.mrf.mxu0
      %v1532 = vadd.f32 0.0, %v1531
      %v1533 = vpop.f32.mrf.mxu0
      %1534 = vmatprep.mubr.f32.mxu0 %v1188
      %1535 = vmatmul.mubr.f32.gmra.mxu0 %v1186
      %v1536 = vpop.f32.mrf.mxu0
      %v1537 = vadd.f32 0.0, %v1536
      %v1538 = vpop.f32.mrf.mxu0
      %1539 = vmatprep.mubr.f32.mxu0 %v1196
      %1540 = vmatmul.mubr.f32.gmra.mxu0 %v1194
      %v1541 = vpop.f32.mrf.mxu0
      %v1542 = vadd.f32 0.0, %v1541
      %v1543 = vpop.f32.mrf.mxu0
      %1544 = vmatprep.mubr.f32.mxu0 %v1204
      %1545 = vmatmul.mubr.f32.gmra.mxu0 %v1202
      %v1546 = vpop.f32.mrf.mxu0
      %v1547 = vadd.f32 0.0, %v1546
      %v1548 = vpop.f32.mrf.mxu0
      %1549 = vmatprep.mubr.f32.mxu0 %v1212
      %1550 = vmatmul.mubr.f32.gmra.mxu0 %v1210
      %v1551 = vpop.f32.mrf.mxu0
      %v1552 = vadd.f32 0.0, %v1551
      %v1553 = vpop.f32.mrf.mxu0
      %1554 = vmatprep.mubr.f32.mxu0 %v1220
      %1555 = vmatmul.mubr.f32.gmra.mxu0 %v1218
      %v1556 = vpop.f32.mrf.mxu0
      %v1557 = vadd.f32 0.0, %v1556
      %v1558 = vpop.f32.mrf.mxu0
      %1559 = vmatprep.mubr.f32.mxu0 %v1228
      %1560 = vmatmul.mubr.f32.gmra.mxu0 %v1226
      %v1561 = vpop.f32.mrf.mxu0
      %v1562 = vadd.f32 0.0, %v1561
      %v1563 = vpop.f32.mrf.mxu0
      %1564 = vmatprep.mubr.f32.mxu0 %v1236
      %1565 = vmatmul.mubr.f32.gmra.mxu0 %v1234
      %v1566 = vpop.f32.mrf.mxu0
      %v1567 = vadd.f32 0.0, %v1566
      %v1568 = vpop.f32.mrf.mxu0
      %1569 = vmatprep.mubr.f32.mxu0 %v1244
      %1570 = vmatmul.mubr.f32.gmra.mxu0 %v1242
      %v1571 = vpop.f32.mrf.mxu0
      %v1572 = vadd.f32 0.0, %v1571
      %v1573 = vpop.f32.mrf.mxu0
      %1574 = vmatprep.mubr.f32.mxu0 %v1252
      %1575 = vmatmul.mubr.f32.gmra.mxu0 %v1250
      %v1576 = vpop.f32.mrf.mxu0
      %v1577 = vadd.f32 0.0, %v1576
      %v1578 = vpop.f32.mrf.mxu0
      %1579 = vmatprep.mubr.f32.mxu0 %v1260
      %1580 = vmatmul.mubr.f32.gmra.mxu0 %v1258
      %v1581 = vpop.f32.mrf.mxu0
      %v1582 = vadd.f32 0.0, %v1581
      %v1583 = vpop.f32.mrf.mxu0
      %1584 = vmatprep.mubr.f32.mxu0 %v1268
      %1585 = vmatmul.mubr.f32.gmra.mxu0 %v1266
      %v1586 = vpop.f32.mrf.mxu0
      %v1587 = vadd.f32 0.0, %v1586
      %v1588 = vpop.f32.mrf.mxu0
      %1589 = vmatprep.mubr.f32.mxu0 %v1276
      %1590 = vmatmul.mubr.f32.gmra.mxu0 %v1274
      %v1591 = vpop.f32.mrf.mxu0
      %v1592 = vadd.f32 0.0, %v1591
      %v1593 = vpop.f32.mrf.mxu0
      %1594 = vmatprep.mubr.f32.mxu0 %v1284
      %1595 = vmatmul.mubr.f32.gmra.mxu0 %v1282
      %v1596 = vpop.f32.mrf.mxu0
      %v1597 = vadd.f32 0.0, %v1596
      %v1598 = vpop.f32.mrf.mxu0
      %1599 = vmatprep.mubr.f32.mxu0 %v1292
      %1600 = vmatmul.mubr.f32.gmra.mxu0 %v1290
      %v1601 = vpop.f32.mrf.mxu0
      %v1602 = vadd.f32 0.0, %v1601
      %v1603 = vpop.f32.mrf.mxu0
      %1604 = vmatprep.mubr.f32.mxu0 %v1300
      %1605 = vmatmul.mubr.f32.gmra.mxu0 %v1298
      %v1606 = vpop.f32.mrf.mxu0
      %v1607 = vadd.f32 0.0, %v1606
      %v1608 = vpop.f32.mrf.mxu0
      %1609 = vmatprep.mubr.f32.mxu0 %v1308
      %1610 = vmatmul.mubr.f32.gmra.mxu0 %v1306
      %v1611 = vpop.f32.mrf.mxu0
      %v1612 = vadd.f32 0.0, %v1611
      %v1613 = vpop.f32.mrf.mxu0
      %1614 = vmatprep.mubr.f32.mxu0 %v1316
      %1615 = vmatmul.mubr.f32.gmra.mxu0 %v1314
      %v1616 = vpop.f32.mrf.mxu0
      %v1617 = vadd.f32 0.0, %v1616
      %v1618 = vpop.f32.mrf.mxu0
      %1619 = vmatprep.mubr.f32.mxu0 %v1324
      %1620 = vmatmul.mubr.f32.gmra.mxu0 %v1322
      %v1621 = vpop.f32.mrf.mxu0
      %v1622 = vadd.f32 0.0, %v1621
      %v1623 = vpop.f32.mrf.mxu0
      %1624 = vmatprep.mubr.f32.mxu0 %v1332
      %1625 = vmatmul.mubr.f32.gmra.mxu0 %v1330
      %v1626 = vpop.f32.mrf.mxu0
      %v1627 = vadd.f32 0.0, %v1626
      %v1628 = vpop.f32.mrf.mxu0
      %1629 = vmatprep.mubr.f32.mxu0 %v1340
      %1630 = vmatmul.mubr.f32.gmra.mxu0 %v1338
      %v1631 = vpop.f32.mrf.mxu0
      %v1632 = vadd.f32 0.0, %v1631
      %v1633 = vpop.f32.mrf.mxu0
      %1634 = vmatprep.mubr.f32.mxu0 %v1348
      %1635 = vmatmul.mubr.f32.gmra.mxu0 %v1346
      %v1636 = vpop.f32.mrf.mxu0
      %v1637 = vadd.f32 0.0, %v1636
      %v1638 = vpop.f32.mrf.mxu0
      %1639 = vmatprep.mubr.f32.mxu0 %v1356
      %1640 = vmatmul.mubr.f32.gmra.mxu0 %v1354
      %v1641 = vpop.f32.mrf.mxu0
      %v1642 = vadd.f32 0.0, %v1641
      %v1643 = vpop.f32.mrf.mxu0
      %1644 = vmatprep.mubr.f32.mxu0 %v1364
      %1645 = vmatmul.mubr.f32.gmra.mxu0 %v1362
      %v1646 = vpop.f32.mrf.mxu0
      %v1647 = vadd.f32 0.0, %v1646
      %v1648 = vpop.f32.mrf.mxu0
      %1649 = vmatprep.mubr.f32.mxu0 %v1372
      %1650 = vmatmul.mubr.f32.gmra.mxu0 %v1370
      %v1651 = vpop.f32.mrf.mxu0
      %v1652 = vadd.f32 0.0, %v1651
      %v1653 = vpop.f32.mrf.mxu0
      %1654 = vmatprep.mubr.f32.mxu0 %v1380
      %1655 = vmatmul.mubr.f32.gmra.mxu0 %v1378
      %v1656 = vpop.f32.mrf.mxu0
      %v1657 = vadd.f32 0.0, %v1656
      %v1658 = vpop.f32.mrf.mxu0
      %1659 = vmatprep.mubr.f32.mxu0 %v1388
      %1660 = vmatmul.mubr.f32.gmra.mxu0 %v1386
      %v1661 = vpop.f32.mrf.mxu0
      %v1662 = vadd.f32 0.0, %v1661
      %v1663 = vpop.f32.mrf.mxu0
      %1664 = vmatprep.mubr.f32.mxu0 %v1396
      %1665 = vmatmul.mubr.f32.gmra.mxu0 %v1394
      %v1666 = vpop.f32.mrf.mxu0
      %v1667 = vadd.f32 0.0, %v1666
      %v1668 = vpop.f32.mrf.mxu0
      %1669 = vmatprep.mubr.f32.mxu0 %v1404
      %1670 = vmatmul.mubr.f32.gmra.mxu0 %v1402
      %v1671 = vpop.f32.mrf.mxu0
      %v1672 = vadd.f32 0.0, %v1671
      %v1673 = vpop.f32.mrf.mxu0
      %1674 = vmatprep.mubr.f32.mxu0 %v1412
      %1675 = vmatmul.mubr.f32.gmra.mxu0 %v1410
      %v1676 = vpop.f32.mrf.mxu0
      %v1677 = vadd.f32 0.0, %v1676
      %v1678 = vpop.f32.mrf.mxu0
      %1679 = vmatprep.mubr.f32.mxu0 %v1420
      %1680 = vmatmul.mubr.f32.gmra.mxu0 %v1418
      %v1681 = vpop.f32.mrf.mxu0
      %v1682 = vadd.f32 0.0, %v1681
      %v1683 = vpop.f32.mrf.mxu0
      %1684 = vmatprep.mubr.f32.mxu0 %v1428
      %1685 = vmatmul.mubr.f32.gmra.mxu0 %v1426
      %v1686 = vpop.f32.mrf.mxu0
      %v1687 = vadd.f32 0.0, %v1686
      %v1688 = vpop.f32.mrf.mxu0
      %1689 = vdwg.mxu0
      %1690 = vmatprep.subr.mxu0 0.0
      %1691 = vmatpush1.msra.mxu0 %v389
      %1692 = vmatprep.subr.mxu0 0.0
      %1693 = vmatpush1.msra.mxu0 %v388
      %1694 = vmatprep.subr.mxu0 0.0
      %1695 = vmatpush1.msra.mxu0 %v387
      %1696 = vmatprep.subr.mxu0 0.0
      %1697 = vmatpush1.msra.mxu0 %v386
      %1698 = vmatprep.subr.mxu0 0.0
      %1699 = vmatpush1.msra.mxu0 %v385
      %1700 = vmatprep.subr.mxu0 0.0
      %1701 = vmatpush1.msra.mxu0 %v384
      %1702 = vmatprep.subr.mxu0 0.0
      %1703 = vmatpush1.msra.mxu0 %v383
      %1704 = vmatprep.subr.mxu0 0.0
      %1705 = vmatpush1.msra.mxu0 %v382
      %1706 = vmatprep.subr.mxu0 0.0
      %1707 = vmatpush1.msra.mxu0 %v381
      %1708 = vmatprep.subr.mxu0 0.0
      %1709 = vmatpush1.msra.mxu0 %v380
      %1710 = vmatprep.subr.mxu0 0.0
      %1711 = vmatpush1.msra.mxu0 %v379
      %1712 = vmatprep.subr.mxu0 0.0
      %1713 = vmatpush1.msra.mxu0 %v378
      %1714 = vmatprep.subr.mxu0 0.0
      %1715 = vmatpush1.msra.mxu0 %v377
      %1716 = vmatprep.subr.mxu0 0.0
      %1717 = vmatpush1.msra.mxu0 %v376
      %1718 = vmatprep.subr.mxu0 0.0
      %1719 = vmatpush1.msra.mxu0 %v375
      %1720 = vmatprep.subr.mxu0 0.0
      %1721 = vmatpush1.msra.mxu0 %v374
      %1722 = vmatprep.subr.mxu0 0.0
      %1723 = vmatpush2.msra.mxu0 %v405
      %1724 = vmatprep.subr.mxu0 0.0
      %1725 = vmatpush2.msra.mxu0 %v404
      %1726 = vmatprep.subr.mxu0 0.0
      %1727 = vmatpush2.msra.mxu0 %v403
      %1728 = vmatprep.subr.mxu0 0.0
      %1729 = vmatpush2.msra.mxu0 %v402
      %1730 = vmatprep.subr.mxu0 0.0
      %1731 = vmatpush2.msra.mxu0 %v401
      %1732 = vmatprep.subr.mxu0 0.0
      %1733 = vmatpush2.msra.mxu0 %v400
      %1734 = vmatprep.subr.mxu0 0.0
      %1735 = vmatpush2.msra.mxu0 %v399
      %1736 = vmatprep.subr.mxu0 0.0
      %1737 = vmatpush2.msra.mxu0 %v398
      %1738 = vmatprep.subr.mxu0 0.0
      %1739 = vmatpush2.msra.mxu0 %v397
      %1740 = vmatprep.subr.mxu0 0.0
      %1741 = vmatpush2.msra.mxu0 %v396
      %1742 = vmatprep.subr.mxu0 0.0
      %1743 = vmatpush2.msra.mxu0 %v395
      %1744 = vmatprep.subr.mxu0 0.0
      %1745 = vmatpush2.msra.mxu0 %v394
      %1746 = vmatprep.subr.mxu0 0.0
      %1747 = vmatpush2.msra.mxu0 %v393
      %1748 = vmatprep.subr.mxu0 0.0
      %1749 = vmatpush2.msra.mxu0 %v392
      %1750 = vmatprep.subr.mxu0 0.0
      %1751 = vmatpush2.msra.mxu0 %v391
      %1752 = vmatprep.subr.mxu0 0.0
      %1753 = vmatpush2.msra.mxu0 %v390
      %1754 = vmatprep.mubr.f32.mxu0 %v1184
      %1755 = vmatmul.mubr.f32.gmra.mxu0 %v1182
      %v1756 = vpop.f32.mrf.mxu0
      %v1757 = vadd.f32 %v1532, %v1756
      %v1758 = vpop.f32.mrf.mxu0
      %1759 = vmatprep.mubr.f32.mxu0 %v1192
      %1760 = vmatmul.mubr.f32.gmra.mxu0 %v1190
      %v1761 = vpop.f32.mrf.mxu0
      %v1762 = vadd.f32 %v1537, %v1761
      %v1763 = vpop.f32.mrf.mxu0
      %1764 = vmatprep.mubr.f32.mxu0 %v1200
      %1765 = vmatmul.mubr.f32.gmra.mxu0 %v1198
      %v1766 = vpop.f32.mrf.mxu0
      %v1767 = vadd.f32 %v1542, %v1766
      %v1768 = vpop.f32.mrf.mxu0
      %1769 = vmatprep.mubr.f32.mxu0 %v1208
      %1770 = vmatmul.mubr.f32.gmra.mxu0 %v1206
      %v1771 = vpop.f32.mrf.mxu0
      %v1772 = vadd.f32 %v1547, %v1771
      %v1773 = vpop.f32.mrf.mxu0
      %1774 = vmatprep.mubr.f32.mxu0 %v1216
      %1775 = vmatmul.mubr.f32.gmra.mxu0 %v1214
      %v1776 = vpop.f32.mrf.mxu0
      %v1777 = vadd.f32 %v1552, %v1776
      %v1778 = vpop.f32.mrf.mxu0
      %1779 = vmatprep.mubr.f32.mxu0 %v1224
      %1780 = vmatmul.mubr.f32.gmra.mxu0 %v1222
      %v1781 = vpop.f32.mrf.mxu0
      %v1782 = vadd.f32 %v1557, %v1781
      %v1783 = vpop.f32.mrf.mxu0
      %1784 = vmatprep.mubr.f32.mxu0 %v1232
      %1785 = vmatmul.mubr.f32.gmra.mxu0 %v1230
      %v1786 = vpop.f32.mrf.mxu0
      %v1787 = vadd.f32 %v1562, %v1786
      %v1788 = vpop.f32.mrf.mxu0
      %1789 = vmatprep.mubr.f32.mxu0 %v1240
      %1790 = vmatmul.mubr.f32.gmra.mxu0 %v1238
      %v1791 = vpop.f32.mrf.mxu0
      %v1792 = vadd.f32 %v1567, %v1791
      %v1793 = vpop.f32.mrf.mxu0
      %1794 = vmatprep.mubr.f32.mxu0 %v1248
      %1795 = vmatmul.mubr.f32.gmra.mxu0 %v1246
      %v1796 = vpop.f32.mrf.mxu0
      %v1797 = vadd.f32 %v1572, %v1796
      %v1798 = vpop.f32.mrf.mxu0
      %1799 = vmatprep.mubr.f32.mxu0 %v1256
      %1800 = vmatmul.mubr.f32.gmra.mxu0 %v1254
      %v1801 = vpop.f32.mrf.mxu0
      %v1802 = vadd.f32 %v1577, %v1801
      %v1803 = vpop.f32.mrf.mxu0
      %1804 = vmatprep.mubr.f32.mxu0 %v1264
      %1805 = vmatmul.mubr.f32.gmra.mxu0 %v1262
      %v1806 = vpop.f32.mrf.mxu0
      %v1807 = vadd.f32 %v1582, %v1806
      %v1808 = vpop.f32.mrf.mxu0
      %1809 = vmatprep.mubr.f32.mxu0 %v1272
      %1810 = vmatmul.mubr.f32.gmra.mxu0 %v1270
      %v1811 = vpop.f32.mrf.mxu0
      %v1812 = vadd.f32 %v1587, %v1811
      %v1813 = vpop.f32.mrf.mxu0
      %1814 = vmatprep.mubr.f32.mxu0 %v1280
      %1815 = vmatmul.mubr.f32.gmra.mxu0 %v1278
      %v1816 = vpop.f32.mrf.mxu0
      %v1817 = vadd.f32 %v1592, %v1816
      %v1818 = vpop.f32.mrf.mxu0
      %1819 = vmatprep.mubr.f32.mxu0 %v1288
      %1820 = vmatmul.mubr.f32.gmra.mxu0 %v1286
      %v1821 = vpop.f32.mrf.mxu0
      %v1822 = vadd.f32 %v1597, %v1821
      %v1823 = vpop.f32.mrf.mxu0
      %1824 = vmatprep.mubr.f32.mxu0 %v1296
      %1825 = vmatmul.mubr.f32.gmra.mxu0 %v1294
      %v1826 = vpop.f32.mrf.mxu0
      %v1827 = vadd.f32 %v1602, %v1826
      %v1828 = vpop.f32.mrf.mxu0
      %1829 = vmatprep.mubr.f32.mxu0 %v1304
      %1830 = vmatmul.mubr.f32.gmra.mxu0 %v1302
      %v1831 = vpop.f32.mrf.mxu0
      %v1832 = vadd.f32 %v1607, %v1831
      %v1833 = vpop.f32.mrf.mxu0
      %1834 = vmatprep.mubr.f32.mxu0 %v1312
      %1835 = vmatmul.mubr.f32.gmra.mxu0 %v1310
      %v1836 = vpop.f32.mrf.mxu0
      %v1837 = vadd.f32 %v1612, %v1836
      %v1838 = vpop.f32.mrf.mxu0
      %1839 = vmatprep.mubr.f32.mxu0 %v1320
      %1840 = vmatmul.mubr.f32.gmra.mxu0 %v1318
      %v1841 = vpop.f32.mrf.mxu0
      %v1842 = vadd.f32 %v1617, %v1841
      %v1843 = vpop.f32.mrf.mxu0
      %1844 = vmatprep.mubr.f32.mxu0 %v1328
      %1845 = vmatmul.mubr.f32.gmra.mxu0 %v1326
      %v1846 = vpop.f32.mrf.mxu0
      %v1847 = vadd.f32 %v1622, %v1846
      %v1848 = vpop.f32.mrf.mxu0
      %1849 = vmatprep.mubr.f32.mxu0 %v1336
      %1850 = vmatmul.mubr.f32.gmra.mxu0 %v1334
      %v1851 = vpop.f32.mrf.mxu0
      %v1852 = vadd.f32 %v1627, %v1851
      %v1853 = vpop.f32.mrf.mxu0
      %1854 = vmatprep.mubr.f32.mxu0 %v1344
      %1855 = vmatmul.mubr.f32.gmra.mxu0 %v1342
      %v1856 = vpop.f32.mrf.mxu0
      %v1857 = vadd.f32 %v1632, %v1856
      %v1858 = vpop.f32.mrf.mxu0
      %1859 = vmatprep.mubr.f32.mxu0 %v1352
      %1860 = vmatmul.mubr.f32.gmra.mxu0 %v1350
      %v1861 = vpop.f32.mrf.mxu0
      %v1862 = vadd.f32 %v1637, %v1861
      %v1863 = vpop.f32.mrf.mxu0
      %1864 = vmatprep.mubr.f32.mxu0 %v1360
      %1865 = vmatmul.mubr.f32.gmra.mxu0 %v1358
      %v1866 = vpop.f32.mrf.mxu0
      %v1867 = vadd.f32 %v1642, %v1866
      %v1868 = vpop.f32.mrf.mxu0
      %1869 = vmatprep.mubr.f32.mxu0 %v1368
      %1870 = vmatmul.mubr.f32.gmra.mxu0 %v1366
      %v1871 = vpop.f32.mrf.mxu0
      %v1872 = vadd.f32 %v1647, %v1871
      %v1873 = vpop.f32.mrf.mxu0
      %1874 = vmatprep.mubr.f32.mxu0 %v1376
      %1875 = vmatmul.mubr.f32.gmra.mxu0 %v1374
      %v1876 = vpop.f32.mrf.mxu0
      %v1877 = vadd.f32 %v1652, %v1876
      %v1878 = vpop.f32.mrf.mxu0
      %1879 = vmatprep.mubr.f32.mxu0 %v1384
      %1880 = vmatmul.mubr.f32.gmra.mxu0 %v1382
      %v1881 = vpop.f32.mrf.mxu0
      %v1882 = vadd.f32 %v1657, %v1881
      %v1883 = vpop.f32.mrf.mxu0
      %1884 = vmatprep.mubr.f32.mxu0 %v1392
      %1885 = vmatmul.mubr.f32.gmra.mxu0 %v1390
      %v1886 = vpop.f32.mrf.mxu0
      %v1887 = vadd.f32 %v1662, %v1886
      %v1888 = vpop.f32.mrf.mxu0
      %1889 = vmatprep.mubr.f32.mxu0 %v1400
      %1890 = vmatmul.mubr.f32.gmra.mxu0 %v1398
      %v1891 = vpop.f32.mrf.mxu0
      %v1892 = vadd.f32 %v1667, %v1891
      %v1893 = vpop.f32.mrf.mxu0
      %1894 = vmatprep.mubr.f32.mxu0 %v1408
      %1895 = vmatmul.mubr.f32.gmra.mxu0 %v1406
      %v1896 = vpop.f32.mrf.mxu0
      %v1897 = vadd.f32 %v1672, %v1896
      %v1898 = vpop.f32.mrf.mxu0
      %1899 = vmatprep.mubr.f32.mxu0 %v1416
      %1900 = vmatmul.mubr.f32.gmra.mxu0 %v1414
      %v1901 = vpop.f32.mrf.mxu0
      %v1902 = vadd.f32 %v1677, %v1901
      %v1903 = vpop.f32.mrf.mxu0
      %1904 = vmatprep.mubr.f32.mxu0 %v1424
      %1905 = vmatmul.mubr.f32.gmra.mxu0 %v1422
      %v1906 = vpop.f32.mrf.mxu0
      %v1907 = vadd.f32 %v1682, %v1906
      %v1908 = vpop.f32.mrf.mxu0
      %1909 = vmatprep.mubr.f32.mxu0 %v1432
      %1910 = vmatmul.mubr.f32.gmra.mxu0 %v1430
      %v1911 = vpop.f32.mrf.mxu0
      %v1912 = vadd.f32 %v1687, %v1911
      %v1913 = vpop.f32.mrf.mxu0
      %1914 = vdwg.mxu0
      %v1915 = vadd.f32 %v1433, %v1757
      %v1916 = vadd.f32 %v1434, %v1762
      %v1917 = vadd.f32 %v1435, %v1767
      %v1918 = vadd.f32 %v1436, %v1772
      %v1919 = vadd.f32 %v1437, %v1777
      %v1920 = vadd.f32 %v1438, %v1782
      %v1921 = vadd.f32 %v1439, %v1787
      %v1922 = vadd.f32 %v1440, %v1792
      %v1923 = vadd.f32 %v1441, %v1797
      %v1924 = vadd.f32 %v1442, %v1802
      %v1925 = vadd.f32 %v1443, %v1807
      %v1926 = vadd.f32 %v1444, %v1812
      %v1927 = vadd.f32 %v1445, %v1817
      %v1928 = vadd.f32 %v1446, %v1822
      %v1929 = vadd.f32 %v1447, %v1827
      %v1930 = vadd.f32 %v1448, %v1832
      %v1931 = vadd.f32 %v1449, %v1837
      %v1932 = vadd.f32 %v1450, %v1842
      %v1933 = vadd.f32 %v1451, %v1847
      %v1934 = vadd.f32 %v1452, %v1852
      %v1935 = vadd.f32 %v1453, %v1857
      %v1936 = vadd.f32 %v1454, %v1862
      %v1937 = vadd.f32 %v1455, %v1867
      %v1938 = vadd.f32 %v1456, %v1872
      %v1939 = vadd.f32 %v1457, %v1877
      %v1940 = vadd.f32 %v1458, %v1882
      %v1941 = vadd.f32 %v1459, %v1887
      %v1942 = vadd.f32 %v1460, %v1892
      %v1943 = vadd.f32 %v1461, %v1897
      %v1944 = vadd.f32 %v1462, %v1902
      %v1945 = vadd.f32 %v1463, %v1907
      %v1946 = vadd.f32 %v1464, %v1912
      %vm1947 = vcmask 64512
      %1948 = vst.msk [vmem:[#allocation2] sm:$0xff] %vm1947, %v1915
      %1949 = vst.msk [vmem:[#allocation2 + $0x8] sm:$0xff] %vm1947, %v1916
      %1950 = vst.msk [vmem:[#allocation2 + $0x10] sm:$0xff] %vm1947, %v1917
      %1951 = vst.msk [vmem:[#allocation2 + $0x18] sm:$0xff] %vm1947, %v1918
      %1952 = vst.msk [vmem:[#allocation2 + $0x20] sm:$0xff] %vm1947, %v1919
      %1953 = vst.msk [vmem:[#allocation2 + $0x28] sm:$0xff] %vm1947, %v1920
      %1954 = vst.msk [vmem:[#allocation2 + $0x30] sm:$0xff] %vm1947, %v1921
      %1955 = vst.msk [vmem:[#allocation2 + $0x38] sm:$0xff] %vm1947, %v1922
      %1956 = vst.msk [vmem:[#allocation2 + $0x40] sm:$0xff] %vm1947, %v1923
      %1957 = vst.msk [vmem:[#allocation2 + $0x48] sm:$0xff] %vm1947, %v1924
      %1958 = vst.msk [vmem:[#allocation2 + $0x50] sm:$0xff] %vm1947, %v1925
      %1959 = vst.msk [vmem:[#allocation2 + $0x58] sm:$0xff] %vm1947, %v1926
      %1960 = vst.msk [vmem:[#allocation2 + $0x60] sm:$0xff] %vm1947, %v1927
      %1961 = vst.msk [vmem:[#allocation2 + $0x68] sm:$0xff] %vm1947, %v1928
      %1962 = vst.msk [vmem:[#allocation2 + $0x70] sm:$0xff] %vm1947, %v1929
      %1963 = vst.msk [vmem:[#allocation2 + $0x78] sm:$0xff] %vm1947, %v1930
      %1964 = vst.msk [vmem:[#allocation2 + $0x80] sm:$0xff] %vm1947, %v1931
      %1965 = vst.msk [vmem:[#allocation2 + $0x88] sm:$0xff] %vm1947, %v1932
      %1966 = vst.msk [vmem:[#allocation2 + $0x90] sm:$0xff] %vm1947, %v1933
      %1967 = vst.msk [vmem:[#allocation2 + $0x98] sm:$0xff] %vm1947, %v1934
      %1968 = vst.msk [vmem:[#allocation2 + $0xa0] sm:$0xff] %vm1947, %v1935
      %1969 = vst.msk [vmem:[#allocation2 + $0xa8] sm:$0xff] %vm1947, %v1936
      %1970 = vst.msk [vmem:[#allocation2 + $0xb0] sm:$0xff] %vm1947, %v1937
      %1971 = vst.msk [vmem:[#allocation2 + $0xb8] sm:$0xff] %vm1947, %v1938
      %1972 = vst.msk [vmem:[#allocation2 + $0xc0] sm:$0xff] %vm1947, %v1939
      %1973 = vst.msk [vmem:[#allocation2 + $0xc8] sm:$0xff] %vm1947, %v1940
      %1974 = vst.msk [vmem:[#allocation2 + $0xd0] sm:$0xff] %vm1947, %v1941
      %1975 = vst.msk [vmem:[#allocation2 + $0xd8] sm:$0xff] %vm1947, %v1942
      %1976 = vst.msk [vmem:[#allocation2 + $0xe0] sm:$0xff] %vm1947, %v1943
      %1977 = vst.msk [vmem:[#allocation2 + $0xe8] sm:$0xff] %vm1947, %v1944
      %1978 = vst.msk [vmem:[#allocation2 + $0xf0] sm:$0xff] %vm1947, %v1945
      %1979 = vst.msk [vmem:[#allocation2 + $0xf8] sm:$0xff] %vm1947, %v1946
      // Predicated region
      $region45: #{tpu_custom_call.1} parent=39 // pred_check
        %p1980 = pneg %p284
      $region46: #{tpu_custom_call.1} parent=39 // pred_check_branch
        %1982 = sbr.rel (%p1980) target = $region48
      $region47: #{tpu_custom_call.1} parent=39 // pred_region
        %v1983 = vld [vmem:[%s270] sm:$0xff]
        %v1984 = vld [vmem:[%s270 + $0x8] sm:$0xff]
        %v1985 = vld [vmem:[%s270 + $0x10] sm:$0xff]
        %v1986 = vld [vmem:[%s270 + $0x18] sm:$0xff]
        %v1987 = vld [vmem:[%s270 + $0x20] sm:$0xff]
        %v1988 = vld [vmem:[%s270 + $0x28] sm:$0xff]
        %v1989 = vld [vmem:[%s270 + $0x30] sm:$0xff]
        %v1990 = vld [vmem:[%s270 + $0x38] sm:$0xff]
        %v1991 = vld [vmem:[%s270 + $0x40] sm:$0xff]
        %v1992 = vld [vmem:[%s270 + $0x48] sm:$0xff]
        %v1993 = vld [vmem:[%s270 + $0x50] sm:$0xff]
        %v1994 = vld [vmem:[%s270 + $0x58] sm:$0xff]
        %v1995 = vld [vmem:[%s270 + $0x60] sm:$0xff]
        %v1996 = vld [vmem:[%s270 + $0x68] sm:$0xff]
        %v1997 = vld [vmem:[%s270 + $0x70] sm:$0xff]
        %v1998 = vld [vmem:[%s270 + $0x78] sm:$0xff]
        %v1999 = vld [vmem:[%s270 + $0x80] sm:$0xff]
        %v2000 = vld [vmem:[%s270 + $0x88] sm:$0xff]
        %v2001 = vld [vmem:[%s270 + $0x90] sm:$0xff]
        %v2002 = vld [vmem:[%s270 + $0x98] sm:$0xff]
        %v2003 = vld [vmem:[%s270 + $0xa0] sm:$0xff]
        %v2004 = vld [vmem:[%s270 + $0xa8] sm:$0xff]
        %v2005 = vld [vmem:[%s270 + $0xb0] sm:$0xff]
        %v2006 = vld [vmem:[%s270 + $0xb8] sm:$0xff]
        %v2007 = vld [vmem:[%s270 + $0xc0] sm:$0xff]
        %v2008 = vld [vmem:[%s270 + $0xc8] sm:$0xff]
        %v2009 = vld [vmem:[%s270 + $0xd0] sm:$0xff]
        %v2010 = vld [vmem:[%s270 + $0xd8] sm:$0xff]
        %v2011 = vld [vmem:[%s270 + $0xe0] sm:$0xff]
        %v2012 = vld [vmem:[%s270 + $0xe8] sm:$0xff]
        %v2013 = vld [vmem:[%s270 + $0xf0] sm:$0xff]
        %v2014 = vld [vmem:[%s270 + $0xf8] sm:$0xff]
        %v2015 = vld [vmem:[#allocation2] sm:$0xff]
        %v2016 = vld [vmem:[#allocation2 + $0x8] sm:$0xff]
        %v2017 = vld [vmem:[#allocation2 + $0x10] sm:$0xff]
        %v2018 = vld [vmem:[#allocation2 + $0x18] sm:$0xff]
        %v2019 = vld [vmem:[#allocation2 + $0x20] sm:$0xff]
        %v2020 = vld [vmem:[#allocation2 + $0x28] sm:$0xff]
        %v2021 = vld [vmem:[#allocation2 + $0x30] sm:$0xff]
        %v2022 = vld [vmem:[#allocation2 + $0x38] sm:$0xff]
        %v2023 = vld [vmem:[#allocation2 + $0x40] sm:$0xff]
        %v2024 = vld [vmem:[#allocation2 + $0x48] sm:$0xff]
        %v2025 = vld [vmem:[#allocation2 + $0x50] sm:$0xff]
        %v2026 = vld [vmem:[#allocation2 + $0x58] sm:$0xff]
        %v2027 = vld [vmem:[#allocation2 + $0x60] sm:$0xff]
        %v2028 = vld [vmem:[#allocation2 + $0x68] sm:$0xff]
        %v2029 = vld [vmem:[#allocation2 + $0x70] sm:$0xff]
        %v2030 = vld [vmem:[#allocation2 + $0x78] sm:$0xff]
        %v2031 = vld [vmem:[#allocation2 + $0x80] sm:$0xff]
        %v2032 = vld [vmem:[#allocation2 + $0x88] sm:$0xff]
        %v2033 = vld [vmem:[#allocation2 + $0x90] sm:$0xff]
        %v2034 = vld [vmem:[#allocation2 + $0x98] sm:$0xff]
        %v2035 = vld [vmem:[#allocation2 + $0xa0] sm:$0xff]
        %v2036 = vld [vmem:[#allocation2 + $0xa8] sm:$0xff]
        %v2037 = vld [vmem:[#allocation2 + $0xb0] sm:$0xff]
        %v2038 = vld [vmem:[#allocation2 + $0xb8] sm:$0xff]
        %v2039 = vld [vmem:[#allocation2 + $0xc0] sm:$0xff]
        %v2040 = vld [vmem:[#allocation2 + $0xc8] sm:$0xff]
        %v2041 = vld [vmem:[#allocation2 + $0xd0] sm:$0xff]
        %v2042 = vld [vmem:[#allocation2 + $0xd8] sm:$0xff]
        %v2043 = vld [vmem:[#allocation2 + $0xe0] sm:$0xff]
        %v2044 = vld [vmem:[#allocation2 + $0xe8] sm:$0xff]
        %v2045 = vld [vmem:[#allocation2 + $0xf0] sm:$0xff]
        %v2046 = vld [vmem:[#allocation2 + $0xf8] sm:$0xff]
        %v2047 = vmul.f32 %v1983, %v2015
        %v2048 = vmul.f32 %v1984, %v2016
        %v2049 = vmul.f32 %v1985, %v2017
        %v2050 = vmul.f32 %v1986, %v2018
        %v2051 = vmul.f32 %v1987, %v2019
        %v2052 = vmul.f32 %v1988, %v2020
        %v2053 = vmul.f32 %v1989, %v2021
        %v2054 = vmul.f32 %v1990, %v2022
        %v2055 = vmul.f32 %v1991, %v2023
        %v2056 = vmul.f32 %v1992, %v2024
        %v2057 = vmul.f32 %v1993, %v2025
        %v2058 = vmul.f32 %v1994, %v2026
        %v2059 = vmul.f32 %v1995, %v2027
        %v2060 = vmul.f32 %v1996, %v2028
        %v2061 = vmul.f32 %v1997, %v2029
        %v2062 = vmul.f32 %v1998, %v2030
        %v2063 = vmul.f32 %v1999, %v2031
        %v2064 = vmul.f32 %v2000, %v2032
        %v2065 = vmul.f32 %v2001, %v2033
        %v2066 = vmul.f32 %v2002, %v2034
        %v2067 = vmul.f32 %v2003, %v2035
        %v2068 = vmul.f32 %v2004, %v2036
        %v2069 = vmul.f32 %v2005, %v2037
        %v2070 = vmul.f32 %v2006, %v2038
        %v2071 = vmul.f32 %v2007, %v2039
        %v2072 = vmul.f32 %v2008, %v2040
        %v2073 = vmul.f32 %v2009, %v2041
        %v2074 = vmul.f32 %v2010, %v2042
        %v2075 = vmul.f32 %v2011, %v2043
        %v2076 = vmul.f32 %v2012, %v2044
        %v2077 = vmul.f32 %v2013, %v2045
        %v2078 = vmul.f32 %v2014, %v2046
        %v2079 = vsel %vm1947, %v2047, 0.0
        %2080 = vadd.xlane.f32.xlu0 %v2079
        %v2081 = vpop.xlane.xlu0 %2080
        %v2082 = vsel %vm1947, %v2048, 0.0
        %2083 = vadd.xlane.f32.xlu0 %v2082
        %v2084 = vpop.xlane.xlu0 %2083
        %v2085 = vsel %vm1947, %v2049, 0.0
        %2086 = vadd.xlane.f32.xlu0 %v2085
        %v2087 = vpop.xlane.xlu0 %2086
        %v2088 = vsel %vm1947, %v2050, 0.0
        %2089 = vadd.xlane.f32.xlu0 %v2088
        %v2090 = vpop.xlane.xlu0 %2089
        %v2091 = vsel %vm1947, %v2051, 0.0
        %2092 = vadd.xlane.f32.xlu0 %v2091
        %v2093 = vpop.xlane.xlu0 %2092
        %v2094 = vsel %vm1947, %v2052, 0.0
        %2095 = vadd.xlane.f32.xlu0 %v2094
        %v2096 = vpop.xlane.xlu0 %2095
        %v2097 = vsel %vm1947, %v2053, 0.0
        %2098 = vadd.xlane.f32.xlu0 %v2097
        %v2099 = vpop.xlane.xlu0 %2098
        %v2100 = vsel %vm1947, %v2054, 0.0
        %2101 = vadd.xlane.f32.xlu0 %v2100
        %v2102 = vpop.xlane.xlu0 %2101
        %v2103 = vsel %vm1947, %v2055, 0.0
        %2104 = vadd.xlane.f32.xlu0 %v2103
        %v2105 = vpop.xlane.xlu0 %2104
        %v2106 = vsel %vm1947, %v2056, 0.0
        %2107 = vadd.xlane.f32.xlu0 %v2106
        %v2108 = vpop.xlane.xlu0 %2107
        %v2109 = vsel %vm1947, %v2057, 0.0
        %2110 = vadd.xlane.f32.xlu0 %v2109
        %v2111 = vpop.xlane.xlu0 %2110
        %v2112 = vsel %vm1947, %v2058, 0.0
        %2113 = vadd.xlane.f32.xlu0 %v2112
        %v2114 = vpop.xlane.xlu0 %2113
        %v2115 = vsel %vm1947, %v2059, 0.0
        %2116 = vadd.xlane.f32.xlu0 %v2115
        %v2117 = vpop.xlane.xlu0 %2116
        %v2118 = vsel %vm1947, %v2060, 0.0
        %2119 = vadd.xlane.f32.xlu0 %v2118
        %v2120 = vpop.xlane.xlu0 %2119
        %v2121 = vsel %vm1947, %v2061, 0.0
        %2122 = vadd.xlane.f32.xlu0 %v2121
        %v2123 = vpop.xlane.xlu0 %2122
        %v2124 = vsel %vm1947, %v2062, 0.0
        %2125 = vadd.xlane.f32.xlu0 %v2124
        %v2126 = vpop.xlane.xlu0 %2125
        %v2127 = vsel %vm1947, %v2063, 0.0
        %2128 = vadd.xlane.f32.xlu0 %v2127
        %v2129 = vpop.xlane.xlu0 %2128
        %v2130 = vsel %vm1947, %v2064, 0.0
        %2131 = vadd.xlane.f32.xlu0 %v2130
        %v2132 = vpop.xlane.xlu0 %2131
        %v2133 = vsel %vm1947, %v2065, 0.0
        %2134 = vadd.xlane.f32.xlu0 %v2133
        %v2135 = vpop.xlane.xlu0 %2134
        %v2136 = vsel %vm1947, %v2066, 0.0
        %2137 = vadd.xlane.f32.xlu0 %v2136
        %v2138 = vpop.xlane.xlu0 %2137
        %v2139 = vsel %vm1947, %v2067, 0.0
        %2140 = vadd.xlane.f32.xlu0 %v2139
        %v2141 = vpop.xlane.xlu0 %2140
        %v2142 = vsel %vm1947, %v2068, 0.0
        %2143 = vadd.xlane.f32.xlu0 %v2142
        %v2144 = vpop.xlane.xlu0 %2143
        %v2145 = vsel %vm1947, %v2069, 0.0
        %2146 = vadd.xlane.f32.xlu0 %v2145
        %v2147 = vpop.xlane.xlu0 %2146
        %v2148 = vsel %vm1947, %v2070, 0.0
        %2149 = vadd.xlane.f32.xlu0 %v2148
        %v2150 = vpop.xlane.xlu0 %2149
        %v2151 = vsel %vm1947, %v2071, 0.0
        %2152 = vadd.xlane.f32.xlu0 %v2151
        %v2153 = vpop.xlane.xlu0 %2152
        %v2154 = vsel %vm1947, %v2072, 0.0
        %2155 = vadd.xlane.f32.xlu0 %v2154
        %v2156 = vpop.xlane.xlu0 %2155
        %v2157 = vsel %vm1947, %v2073, 0.0
        %2158 = vadd.xlane.f32.xlu0 %v2157
        %v2159 = vpop.xlane.xlu0 %2158
        %v2160 = vsel %vm1947, %v2074, 0.0
        %2161 = vadd.xlane.f32.xlu0 %v2160
        %v2162 = vpop.xlane.xlu0 %2161
        %v2163 = vsel %vm1947, %v2075, 0.0
        %2164 = vadd.xlane.f32.xlu0 %v2163
        %v2165 = vpop.xlane.xlu0 %2164
        %v2166 = vsel %vm1947, %v2076, 0.0
        %2167 = vadd.xlane.f32.xlu0 %v2166
        %v2168 = vpop.xlane.xlu0 %2167
        %v2169 = vsel %vm1947, %v2077, 0.0
        %2170 = vadd.xlane.f32.xlu0 %v2169
        %v2171 = vpop.xlane.xlu0 %2170
        %v2172 = vsel %vm1947, %v2078, 0.0
        %2173 = vadd.xlane.f32.xlu0 %v2172
        %v2174 = vpop.xlane.xlu0 %2173
        %v2175 = vld [vmem:[%s276] sm:$0xff]
        %v2176 = vld [vmem:[%s276 + $0x8] sm:$0xff]
        %v2177 = vld [vmem:[%s276 + $0x10] sm:$0xff]
        %v2178 = vld [vmem:[%s276 + $0x18] sm:$0xff]
        %v2179 = vld [vmem:[%s276 + $0x20] sm:$0xff]
        %v2180 = vld [vmem:[%s276 + $0x28] sm:$0xff]
        %v2181 = vld [vmem:[%s276 + $0x30] sm:$0xff]
        %v2182 = vld [vmem:[%s276 + $0x38] sm:$0xff]
        %v2183 = vld [vmem:[%s276 + $0x40] sm:$0xff]
        %v2184 = vld [vmem:[%s276 + $0x48] sm:$0xff]
        %v2185 = vld [vmem:[%s276 + $0x50] sm:$0xff]
        %v2186 = vld [vmem:[%s276 + $0x58] sm:$0xff]
        %v2187 = vld [vmem:[%s276 + $0x60] sm:$0xff]
        %v2188 = vld [vmem:[%s276 + $0x68] sm:$0xff]
        %v2189 = vld [vmem:[%s276 + $0x70] sm:$0xff]
        %v2190 = vld [vmem:[%s276 + $0x78] sm:$0xff]
        %v2191 = vld [vmem:[%s276 + $0x80] sm:$0xff]
        %v2192 = vld [vmem:[%s276 + $0x88] sm:$0xff]
        %v2193 = vld [vmem:[%s276 + $0x90] sm:$0xff]
        %v2194 = vld [vmem:[%s276 + $0x98] sm:$0xff]
        %v2195 = vld [vmem:[%s276 + $0xa0] sm:$0xff]
        %v2196 = vld [vmem:[%s276 + $0xa8] sm:$0xff]
        %v2197 = vld [vmem:[%s276 + $0xb0] sm:$0xff]
        %v2198 = vld [vmem:[%s276 + $0xb8] sm:$0xff]
        %v2199 = vld [vmem:[%s276 + $0xc0] sm:$0xff]
        %v2200 = vld [vmem:[%s276 + $0xc8] sm:$0xff]
        %v2201 = vld [vmem:[%s276 + $0xd0] sm:$0xff]
        %v2202 = vld [vmem:[%s276 + $0xd8] sm:$0xff]
        %v2203 = vld [vmem:[%s276 + $0xe0] sm:$0xff]
        %v2204 = vld [vmem:[%s276 + $0xe8] sm:$0xff]
        %v2205 = vld [vmem:[%s276 + $0xf0] sm:$0xff]
        %v2206 = vld [vmem:[%s276 + $0xf8] sm:$0xff]
        %v2207 = vmul.f32 %v2175, %v2015
        %v2208 = vmul.f32 %v2176, %v2016
        %v2209 = vmul.f32 %v2177, %v2017
        %v2210 = vmul.f32 %v2178, %v2018
        %v2211 = vmul.f32 %v2179, %v2019
        %v2212 = vmul.f32 %v2180, %v2020
        %v2213 = vmul.f32 %v2181, %v2021
        %v2214 = vmul.f32 %v2182, %v2022
        %v2215 = vmul.f32 %v2183, %v2023
        %v2216 = vmul.f32 %v2184, %v2024
        %v2217 = vmul.f32 %v2185, %v2025
        %v2218 = vmul.f32 %v2186, %v2026
        %v2219 = vmul.f32 %v2187, %v2027
        %v2220 = vmul.f32 %v2188, %v2028
        %v2221 = vmul.f32 %v2189, %v2029
        %v2222 = vmul.f32 %v2190, %v2030
        %v2223 = vmul.f32 %v2191, %v2031
        %v2224 = vmul.f32 %v2192, %v2032
        %v2225 = vmul.f32 %v2193, %v2033
        %v2226 = vmul.f32 %v2194, %v2034
        %v2227 = vmul.f32 %v2195, %v2035
        %v2228 = vmul.f32 %v2196, %v2036
        %v2229 = vmul.f32 %v2197, %v2037
        %v2230 = vmul.f32 %v2198, %v2038
        %v2231 = vmul.f32 %v2199, %v2039
        %v2232 = vmul.f32 %v2200, %v2040
        %v2233 = vmul.f32 %v2201, %v2041
        %v2234 = vmul.f32 %v2202, %v2042
        %v2235 = vmul.f32 %v2203, %v2043
        %v2236 = vmul.f32 %v2204, %v2044
        %v2237 = vmul.f32 %v2205, %v2045
        %v2238 = vmul.f32 %v2206, %v2046
        %v2239 = vsel %vm1947, %v2207, 0.0
        %2240 = vadd.xlane.f32.xlu0 %v2239
        %v2241 = vpop.xlane.xlu0 %2240
        %v2242 = vsel %vm1947, %v2208, 0.0
        %2243 = vadd.xlane.f32.xlu0 %v2242
        %v2244 = vpop.xlane.xlu0 %2243
        %v2245 = vsel %vm1947, %v2209, 0.0
        %2246 = vadd.xlane.f32.xlu0 %v2245
        %v2247 = vpop.xlane.xlu0 %2246
        %v2248 = vsel %vm1947, %v2210, 0.0
        %2249 = vadd.xlane.f32.xlu0 %v2248
        %v2250 = vpop.xlane.xlu0 %2249
        %v2251 = vsel %vm1947, %v2211, 0.0
        %2252 = vadd.xlane.f32.xlu0 %v2251
        %v2253 = vpop.xlane.xlu0 %2252
        %v2254 = vsel %vm1947, %v2212, 0.0
        %2255 = vadd.xlane.f32.xlu0 %v2254
        %v2256 = vpop.xlane.xlu0 %2255
        %v2257 = vsel %vm1947, %v2213, 0.0
        %2258 = vadd.xlane.f32.xlu0 %v2257
        %v2259 = vpop.xlane.xlu0 %2258
        %v2260 = vsel %vm1947, %v2214, 0.0
        %2261 = vadd.xlane.f32.xlu0 %v2260
        %v2262 = vpop.xlane.xlu0 %2261
        %v2263 = vsel %vm1947, %v2215, 0.0
        %2264 = vadd.xlane.f32.xlu0 %v2263
        %v2265 = vpop.xlane.xlu0 %2264
        %v2266 = vsel %vm1947, %v2216, 0.0
        %2267 = vadd.xlane.f32.xlu0 %v2266
        %v2268 = vpop.xlane.xlu0 %2267
        %v2269 = vsel %vm1947, %v2217, 0.0
        %2270 = vadd.xlane.f32.xlu0 %v2269
        %v2271 = vpop.xlane.xlu0 %2270
        %v2272 = vsel %vm1947, %v2218, 0.0
        %2273 = vadd.xlane.f32.xlu0 %v2272
        %v2274 = vpop.xlane.xlu0 %2273
        %v2275 = vsel %vm1947, %v2219, 0.0
        %2276 = vadd.xlane.f32.xlu0 %v2275
        %v2277 = vpop.xlane.xlu0 %2276
        %v2278 = vsel %vm1947, %v2220, 0.0
        %2279 = vadd.xlane.f32.xlu0 %v2278
        %v2280 = vpop.xlane.xlu0 %2279
        %v2281 = vsel %vm1947, %v2221, 0.0
        %2282 = vadd.xlane.f32.xlu0 %v2281
        %v2283 = vpop.xlane.xlu0 %2282
        %v2284 = vsel %vm1947, %v2222, 0.0
        %2285 = vadd.xlane.f32.xlu0 %v2284
        %v2286 = vpop.xlane.xlu0 %2285
        %v2287 = vsel %vm1947, %v2223, 0.0
        %2288 = vadd.xlane.f32.xlu0 %v2287
        %v2289 = vpop.xlane.xlu0 %2288
        %v2290 = vsel %vm1947, %v2224, 0.0
        %2291 = vadd.xlane.f32.xlu0 %v2290
        %v2292 = vpop.xlane.xlu0 %2291
        %v2293 = vsel %vm1947, %v2225, 0.0
        %2294 = vadd.xlane.f32.xlu0 %v2293
        %v2295 = vpop.xlane.xlu0 %2294
        %v2296 = vsel %vm1947, %v2226, 0.0
        %2297 = vadd.xlane.f32.xlu0 %v2296
        %v2298 = vpop.xlane.xlu0 %2297
        %v2299 = vsel %vm1947, %v2227, 0.0
        %2300 = vadd.xlane.f32.xlu0 %v2299
        %v2301 = vpop.xlane.xlu0 %2300
        %v2302 = vsel %vm1947, %v2228, 0.0
        %2303 = vadd.xlane.f32.xlu0 %v2302
        %v2304 = vpop.xlane.xlu0 %2303
        %v2305 = vsel %vm1947, %v2229, 0.0
        %2306 = vadd.xlane.f32.xlu0 %v2305
        %v2307 = vpop.xlane.xlu0 %2306
        %v2308 = vsel %vm1947, %v2230, 0.0
        %2309 = vadd.xlane.f32.xlu0 %v2308
        %v2310 = vpop.xlane.xlu0 %2309
        %v2311 = vsel %vm1947, %v2231, 0.0
        %2312 = vadd.xlane.f32.xlu0 %v2311
        %v2313 = vpop.xlane.xlu0 %2312
        %v2314 = vsel %vm1947, %v2232, 0.0
        %2315 = vadd.xlane.f32.xlu0 %v2314
        %v2316 = vpop.xlane.xlu0 %2315
        %v2317 = vsel %vm1947, %v2233, 0.0
        %2318 = vadd.xlane.f32.xlu0 %v2317
        %v2319 = vpop.xlane.xlu0 %2318
        %v2320 = vsel %vm1947, %v2234, 0.0
        %2321 = vadd.xlane.f32.xlu0 %v2320
        %v2322 = vpop.xlane.xlu0 %2321
        %v2323 = vsel %vm1947, %v2235, 0.0
        %2324 = vadd.xlane.f32.xlu0 %v2323
        %v2325 = vpop.xlane.xlu0 %2324
        %v2326 = vsel %vm1947, %v2236, 0.0
        %2327 = vadd.xlane.f32.xlu0 %v2326
        %v2328 = vpop.xlane.xlu0 %2327
        %v2329 = vsel %vm1947, %v2237, 0.0
        %2330 = vadd.xlane.f32.xlu0 %v2329
        %v2331 = vpop.xlane.xlu0 %2330
        %v2332 = vsel %vm1947, %v2238, 0.0
        %2333 = vadd.xlane.f32.xlu0 %v2332
        %v2334 = vpop.xlane.xlu0 %2333
        %v2335 = vlog2.pop %v2081
        %v2336 = vmul.f32 %v2335, 0.6931472
        %v2337 = vlog2.pop %v2084
        %v2338 = vmul.f32 %v2337, 0.6931472
        %v2339 = vlog2.pop %v2087
        %v2340 = vmul.f32 %v2339, 0.6931472
        %v2341 = vlog2.pop %v2090
        %v2342 = vmul.f32 %v2341, 0.6931472
        %v2343 = vlog2.pop %v2093
        %v2344 = vmul.f32 %v2343, 0.6931472
        %v2345 = vlog2.pop %v2096
        %v2346 = vmul.f32 %v2345, 0.6931472
        %v2347 = vlog2.pop %v2099
        %v2348 = vmul.f32 %v2347, 0.6931472
        %v2349 = vlog2.pop %v2102
        %v2350 = vmul.f32 %v2349, 0.6931472
        %v2351 = vlog2.pop %v2105
        %v2352 = vmul.f32 %v2351, 0.6931472
        %v2353 = vlog2.pop %v2108
        %v2354 = vmul.f32 %v2353, 0.6931472
        %v2355 = vlog2.pop %v2111
        %v2356 = vmul.f32 %v2355, 0.6931472
        %v2357 = vlog2.pop %v2114
        %v2358 = vmul.f32 %v2357, 0.6931472
        %v2359 = vlog2.pop %v2117
        %v2360 = vmul.f32 %v2359, 0.6931472
        %v2361 = vlog2.pop %v2120
        %v2362 = vmul.f32 %v2361, 0.6931472
        %v2363 = vlog2.pop %v2123
        %v2364 = vmul.f32 %v2363, 0.6931472
        %v2365 = vlog2.pop %v2126
        %v2366 = vmul.f32 %v2365, 0.6931472
        %v2367 = vlog2.pop %v2129
        %v2368 = vmul.f32 %v2367, 0.6931472
        %v2369 = vlog2.pop %v2132
        %v2370 = vmul.f32 %v2369, 0.6931472
        %v2371 = vlog2.pop %v2135
        %v2372 = vmul.f32 %v2371, 0.6931472
        %v2373 = vlog2.pop %v2138
        %v2374 = vmul.f32 %v2373, 0.6931472
        %v2375 = vlog2.pop %v2141
        %v2376 = vmul.f32 %v2375, 0.6931472
        %v2377 = vlog2.pop %v2144
        %v2378 = vmul.f32 %v2377, 0.6931472
        %v2379 = vlog2.pop %v2147
        %v2380 = vmul.f32 %v2379, 0.6931472
        %v2381 = vlog2.pop %v2150
        %v2382 = vmul.f32 %v2381, 0.6931472
        %v2383 = vlog2.pop %v2153
        %v2384 = vmul.f32 %v2383, 0.6931472
        %v2385 = vlog2.pop %v2156
        %v2386 = vmul.f32 %v2385, 0.6931472
        %v2387 = vlog2.pop %v2159
        %v2388 = vmul.f32 %v2387, 0.6931472
        %v2389 = vlog2.pop %v2162
        %v2390 = vmul.f32 %v2389, 0.6931472
        %v2391 = vlog2.pop %v2165
        %v2392 = vmul.f32 %v2391, 0.6931472
        %v2393 = vlog2.pop %v2168
        %v2394 = vmul.f32 %v2393, 0.6931472
        %v2395 = vlog2.pop %v2171
        %v2396 = vmul.f32 %v2395, 0.6931472
        %v2397 = vlog2.pop %v2174
        %v2398 = vmul.f32 %v2397, 0.6931472
        %v2399 = vlog2.pop %v2241
        %v2400 = vmul.f32 %v2399, 0.6931472
        %v2401 = vlog2.pop %v2244
        %v2402 = vmul.f32 %v2401, 0.6931472
        %v2403 = vlog2.pop %v2247
        %v2404 = vmul.f32 %v2403, 0.6931472
        %v2405 = vlog2.pop %v2250
        %v2406 = vmul.f32 %v2405, 0.6931472
        %v2407 = vlog2.pop %v2253
        %v2408 = vmul.f32 %v2407, 0.6931472
        %v2409 = vlog2.pop %v2256
        %v2410 = vmul.f32 %v2409, 0.6931472
        %v2411 = vlog2.pop %v2259
        %v2412 = vmul.f32 %v2411, 0.6931472
        %v2413 = vlog2.pop %v2262
        %v2414 = vmul.f32 %v2413, 0.6931472
        %v2415 = vlog2.pop %v2265
        %v2416 = vmul.f32 %v2415, 0.6931472
        %v2417 = vlog2.pop %v2268
        %v2418 = vmul.f32 %v2417, 0.6931472
        %v2419 = vlog2.pop %v2271
        %v2420 = vmul.f32 %v2419, 0.6931472
        %v2421 = vlog2.pop %v2274
        %v2422 = vmul.f32 %v2421, 0.6931472
        %v2423 = vlog2.pop %v2277
        %v2424 = vmul.f32 %v2423, 0.6931472
        %v2425 = vlog2.pop %v2280
        %v2426 = vmul.f32 %v2425, 0.6931472
        %v2427 = vlog2.pop %v2283
        %v2428 = vmul.f32 %v2427, 0.6931472
        %v2429 = vlog2.pop %v2286
        %v2430 = vmul.f32 %v2429, 0.6931472
        %v2431 = vlog2.pop %v2289
        %v2432 = vmul.f32 %v2431, 0.6931472
        %v2433 = vlog2.pop %v2292
        %v2434 = vmul.f32 %v2433, 0.6931472
        %v2435 = vlog2.pop %v2295
        %v2436 = vmul.f32 %v2435, 0.6931472
        %v2437 = vlog2.pop %v2298
        %v2438 = vmul.f32 %v2437, 0.6931472
        %v2439 = vlog2.pop %v2301
        %v2440 = vmul.f32 %v2439, 0.6931472
        %v2441 = vlog2.pop %v2304
        %v2442 = vmul.f32 %v2441, 0.6931472
        %v2443 = vlog2.pop %v2307
        %v2444 = vmul.f32 %v2443, 0.6931472
        %v2445 = vlog2.pop %v2310
        %v2446 = vmul.f32 %v2445, 0.6931472
        %v2447 = vlog2.pop %v2313
        %v2448 = vmul.f32 %v2447, 0.6931472
        %v2449 = vlog2.pop %v2316
        %v2450 = vmul.f32 %v2449, 0.6931472
        %v2451 = vlog2.pop %v2319
        %v2452 = vmul.f32 %v2451, 0.6931472
        %v2453 = vlog2.pop %v2322
        %v2454 = vmul.f32 %v2453, 0.6931472
        %v2455 = vlog2.pop %v2325
        %v2456 = vmul.f32 %v2455, 0.6931472
        %v2457 = vlog2.pop %v2328
        %v2458 = vmul.f32 %v2457, 0.6931472
        %v2459 = vlog2.pop %v2331
        %v2460 = vmul.f32 %v2459, 0.6931472
        %v2461 = vlog2.pop %v2334
        %v2462 = vmul.f32 %v2461, 0.6931472
        %v2463 = vsub.f32 %v2336, %v2400
        %v2464 = vsub.f32 %v2338, %v2402
        %v2465 = vsub.f32 %v2340, %v2404
        %v2466 = vsub.f32 %v2342, %v2406
        %v2467 = vsub.f32 %v2344, %v2408
        %v2468 = vsub.f32 %v2346, %v2410
        %v2469 = vsub.f32 %v2348, %v2412
        %v2470 = vsub.f32 %v2350, %v2414
        %v2471 = vsub.f32 %v2352, %v2416
        %v2472 = vsub.f32 %v2354, %v2418
        %v2473 = vsub.f32 %v2356, %v2420
        %v2474 = vsub.f32 %v2358, %v2422
        %v2475 = vsub.f32 %v2360, %v2424
        %v2476 = vsub.f32 %v2362, %v2426
        %v2477 = vsub.f32 %v2364, %v2428
        %v2478 = vsub.f32 %v2366, %v2430
        %v2479 = vsub.f32 %v2368, %v2432
        %v2480 = vsub.f32 %v2370, %v2434
        %v2481 = vsub.f32 %v2372, %v2436
        %v2482 = vsub.f32 %v2374, %v2438
        %v2483 = vsub.f32 %v2376, %v2440
        %v2484 = vsub.f32 %v2378, %v2442
        %v2485 = vsub.f32 %v2380, %v2444
        %v2486 = vsub.f32 %v2382, %v2446
        %v2487 = vsub.f32 %v2384, %v2448
        %v2488 = vsub.f32 %v2386, %v2450
        %v2489 = vsub.f32 %v2388, %v2452
        %v2490 = vsub.f32 %v2390, %v2454
        %v2491 = vsub.f32 %v2392, %v2456
        %v2492 = vsub.f32 %v2394, %v2458
        %v2493 = vsub.f32 %v2396, %v2460
        %v2494 = vsub.f32 %v2398, %v2462
        %vm2495 = vcmask 7168
        %2496 = vst.msk [vmem:[%s282] sm:$0xff] %vm2495, %v2463
        %2497 = vst.msk [vmem:[%s282 + $0x8] sm:$0xff] %vm2495, %v2464
        %2498 = vst.msk [vmem:[%s282 + $0x10] sm:$0xff] %vm2495, %v2465
        %2499 = vst.msk [vmem:[%s282 + $0x18] sm:$0xff] %vm2495, %v2466
        %2500 = vst.msk [vmem:[%s282 + $0x20] sm:$0xff] %vm2495, %v2467
        %2501 = vst.msk [vmem:[%s282 + $0x28] sm:$0xff] %vm2495, %v2468
        %2502 = vst.msk [vmem:[%s282 + $0x30] sm:$0xff] %vm2495, %v2469
        %2503 = vst.msk [vmem:[%s282 + $0x38] sm:$0xff] %vm2495, %v2470
        %2504 = vst.msk [vmem:[%s282 + $0x40] sm:$0xff] %vm2495, %v2471
        %2505 = vst.msk [vmem:[%s282 + $0x48] sm:$0xff] %vm2495, %v2472
        %2506 = vst.msk [vmem:[%s282 + $0x50] sm:$0xff] %vm2495, %v2473
        %2507 = vst.msk [vmem:[%s282 + $0x58] sm:$0xff] %vm2495, %v2474
        %2508 = vst.msk [vmem:[%s282 + $0x60] sm:$0xff] %vm2495, %v2475
        %2509 = vst.msk [vmem:[%s282 + $0x68] sm:$0xff] %vm2495, %v2476
        %2510 = vst.msk [vmem:[%s282 + $0x70] sm:$0xff] %vm2495, %v2477
        %2511 = vst.msk [vmem:[%s282 + $0x78] sm:$0xff] %vm2495, %v2478
        %2512 = vst.msk [vmem:[%s282 + $0x80] sm:$0xff] %vm2495, %v2479
        %2513 = vst.msk [vmem:[%s282 + $0x88] sm:$0xff] %vm2495, %v2480
        %2514 = vst.msk [vmem:[%s282 + $0x90] sm:$0xff] %vm2495, %v2481
        %2515 = vst.msk [vmem:[%s282 + $0x98] sm:$0xff] %vm2495, %v2482
        %2516 = vst.msk [vmem:[%s282 + $0xa0] sm:$0xff] %vm2495, %v2483
        %2517 = vst.msk [vmem:[%s282 + $0xa8] sm:$0xff] %vm2495, %v2484
        %2518 = vst.msk [vmem:[%s282 + $0xb0] sm:$0xff] %vm2495, %v2485
        %2519 = vst.msk [vmem:[%s282 + $0xb8] sm:$0xff] %vm2495, %v2486
        %2520 = vst.msk [vmem:[%s282 + $0xc0] sm:$0xff] %vm2495, %v2487
        %2521 = vst.msk [vmem:[%s282 + $0xc8] sm:$0xff] %vm2495, %v2488
        %2522 = vst.msk [vmem:[%s282 + $0xd0] sm:$0xff] %vm2495, %v2489
        %2523 = vst.msk [vmem:[%s282 + $0xd8] sm:$0xff] %vm2495, %v2490
        %2524 = vst.msk [vmem:[%s282 + $0xe0] sm:$0xff] %vm2495, %v2491
        %2525 = vst.msk [vmem:[%s282 + $0xe8] sm:$0xff] %vm2495, %v2492
        %2526 = vst.msk [vmem:[%s282 + $0xf0] sm:$0xff] %vm2495, %v2493
        %2527 = vst.msk [vmem:[%s282 + $0xf8] sm:$0xff] %vm2495, %v2494
      $region48: #{tpu_custom_call.1} parent=39 // pred_fallthru
        _
      %s2528 = smul.u32 32, %s20
      %p2529 = scmp.lt.s32.totalorder %s2528, 63
      %s2530 = scalar_select %p2529, %s2528, 63
      %s2531 = smul.addr %s2530, 8
      %s2532 = scalar_lea.vmem %s5, %s2531
      // Predicated region
      $region49: #{tpu_custom_call.1} parent=39 // pred_check
        %p2533 = pneg %p166
      $region50: #{tpu_custom_call.1} parent=39 // pred_check_branch
        %2535 = sbr.rel (%p2533) target = $region52
      $region51: #{tpu_custom_call.1} parent=39 // pred_region
        %s2536 = smul.u32 32, %s20
      $region52: #{tpu_custom_call.1} parent=39 // pred_fallthru
        _
    $region40: #{tpu_custom_call.1} parent=5 // pred_fallthru
      _
    %p2537 = scmp.le.s32.totalorder 2, %s11
    // Predicated region
    $region53: #{tpu_custom_call.1} parent=5 // pred_check
      %p2538 = pneg %p2537
    $region54: #{tpu_custom_call.1} parent=5 // pred_check_branch
      %2540 = sbr.rel (%p2538) target = $region56
    $region55: #{tpu_custom_call.1} parent=5 // pred_region
      %s2541 = ssub.s32 %s11, 2
      // Predicated region
      $region57: #{tpu_custom_call.1} parent=55 // pred_check
        %p2542 = pneg %p172
      $region58: #{tpu_custom_call.1} parent=55 // pred_check_branch
        %2544 = sbr.rel (%p2542) target = $region60
      $region59: #{tpu_custom_call.1} parent=55 // pred_region
        %s2545 = smul.u32 32, %s22
        %p2546 = scmp.lt.s32.totalorder %s2545, 63
        %s2547 = scalar_select %p2546, %s2545, 63
        %s2548 = smul.addr %s2547, 8
        %s2549 = scalar_lea.vmem %s5, %s2548
      $region60: #{tpu_custom_call.1} parent=55 // pred_fallthru
        _
    $region56: #{tpu_custom_call.1} parent=5 // pred_fallthru
      _
  $region6: #{tpu_custom_call.1} parent=0 // loop_footer
    %s15 = sadd.s32 1, %s11
  $region7: #{tpu_custom_call.1} parent=0 // loop_footer_branch
    %10 = sbr.rel target = $region3
  $region8: #{tpu_custom_call.1} parent=0 // loop_exit
    _

</llo_original>
